<compile_context>
chip_gen: v7x
topology: tpu7x:2x2x1
jax: 0.10.0
libtpu: 0.0.40
codegen_flags: <defaults>
</compile_context>

<pallas_src>
import math

import jax
import jax.numpy as jnp
from jax.experimental import pallas as pl
from jax.experimental.pallas import tpu as pltpu


def _round_up(x, m):
    return (x + m - 1) // m * m


def _pad2d(x, rows, cols):
    r, c = x.shape
    if r == rows and c == cols:
        return x
    return jnp.pad(x, ((0, rows - r), (0, cols - c)))


# ----------------------- tiled matmul + LeakyReLU(0.2) ---------------------- #

def _matmul_lrelu_kernel(a_ref, w_ref, o_ref, acc_ref):
    k = pl.program_id(2)

    @pl.when(k == 0)
    def _():
        acc_ref[...] = jnp.zeros_like(acc_ref)

    acc_ref[...] += jnp.dot(a_ref[...], w_ref[...],
                            preferred_element_type=jnp.float32)

    @pl.when(k == pl.num_programs(2) - 1)
    def _():
        acc = acc_ref[...]
        o_ref[...] = jnp.where(acc >= 0.0, acc, 0.2 * acc).astype(o_ref.dtype)


def matmul_lrelu(a, w, *, out_dtype=jnp.bfloat16,
                 tm_target=256, tn_target=256, tk_target=512):
    """(M, K) @ (K, N) with fused LeakyReLU(0.2).

    bf16 MXU inputs, f32 accumulation.  Operands are zero-padded to tile
    multiples (zero padding is exact for the dot, and LeakyReLU(0) == 0, so
    padded rows/cols are inert and sliced away afterwards).
    """
    M, K = a.shape
    Kw, N = w.shape
    assert K == Kw

    tm = min(tm_target, _round_up(M, 16))     # bf16 sublane-friendly
    tn = min(tn_target, _round_up(N, 128))    # lane dim of output
    tk = min(tk_target, _round_up(K, 128))    # contraction (lane dim of A)
    Mp, Kp, Np = _round_up(M, tm), _round_up(K, tk), _round_up(N, tn)

    a_p = _pad2d(a.astype(jnp.bfloat16), Mp, Kp)
    w_p = _pad2d(w.astype(jnp.bfloat16), Kp, Np)

    grid = (Mp // tm, Np // tn, Kp // tk)
    out_bytes = jnp.dtype(out_dtype).itemsize

    out = pl.pallas_call(
        _matmul_lrelu_kernel,
        out_shape=jax.ShapeDtypeStruct((Mp, Np), out_dtype),
        grid_spec=pltpu.PrefetchScalarGridSpec(
            num_scalar_prefetch=0,
            grid=grid,
            in_specs=[pl.BlockSpec((tm, tk), lambda i, j, k: (i, k)),
                      pl.BlockSpec((tk, tn), lambda i, j, k: (k, j))],
            out_specs=pl.BlockSpec((tm, tn), lambda i, j, k: (i, j)),
            scratch_shapes=[pltpu.VMEM((tm, tn), jnp.float32)],
        ),
        compiler_params=pltpu.CompilerParams(
            dimension_semantics=("parallel", "parallel", "arbitrary"),
            vmem_limit_bytes=64 << 20),
        cost_estimate=pl.CostEstimate(
            flops=2 * Mp * Kp * Np,
            transcendentals=0,
            bytes_accessed=2 * (Mp * Kp + Kp * Np) + Mp * Np * out_bytes),
    )(a_p, w_p)
    return out[:M, :N]


# ----------------- final 2x2/s2 conv: VPU reduce + bias + sigmoid ------------ #

def _final_conv_kernel(a_ref, w_ref, b_ref, o_ref):
    # Single output channel is lane-sparse on the MXU -> VPU reduction instead.
    bias = b_ref[0]
    prod = a_ref[...] * w_ref[...]                        # (Mp, Kp) f32
    acc = jnp.sum(prod, axis=-1, keepdims=True) + bias    # (Mp, 1)
    z = jnp.exp(-jnp.abs(acc))                            # stable sigmoid
    o_ref[...] = jnp.where(acc >= 0.0, 1.0 / (1.0 + z), z / (1.0 + z))


def final_conv_sigmoid(a, w_row, bias):
    """Each row of (M, K) dotted with one weight row + bias, sigmoid -> (M,)."""
    M, K = a.shape
    Mp = _round_up(M, 8)
    Kp = _round_up(K, 128)
    a_p = _pad2d(a.astype(jnp.float32), Mp, Kp)
    w_p = _pad2d(w_row.astype(jnp.float32).reshape(1, K), 1, Kp)
    b_s = jnp.asarray(bias, jnp.float32).reshape(1)

    out = pl.pallas_call(
        _final_conv_kernel,
        out_shape=jax.ShapeDtypeStruct((Mp, 1), jnp.float32),
        in_specs=[pl.BlockSpec((Mp, Kp), lambda: (0, 0)),
                  pl.BlockSpec((1, Kp), lambda: (0, 0)),
                  pl.BlockSpec(memory_space=pltpu.MemorySpace.SMEM)],
        out_specs=pl.BlockSpec((Mp, 1), lambda: (0, 0)),
    )(a_p, w_p, b_s)
    return out[:M, 0]


# --------------------------------- JAX glue --------------------------------- #

def _im2col_stride2(x_nhwc, k, pad):
    """Stride-2 k x k patches -> ((B*OH*OW, k*k*C), (B, OH, OW))."""
    B, H, W, C = x_nhwc.shape
    if pad > 0:
        x_nhwc = jnp.pad(x_nhwc, ((0, 0), (pad, pad), (pad, pad), (0, 0)))
    OH = (H + 2 * pad - k) // 2 + 1
    OW = (W + 2 * pad - k) // 2 + 1
    patches = [x_nhwc[:, kh:kh + 2 * OH:2, kw:kw + 2 * OW:2, :]
               for kh in range(k) for kw in range(k)]
    cols = jnp.concatenate(patches, axis=-1)          # (B, OH, OW, k*k*C)
    return cols.reshape(B * OH * OW, k * k * C), (B, OH, OW)


class Discriminator:
    """JAX/Pallas port of the PyTorch conditional-DCGAN Discriminator."""

    def __init__(self, n_categories, channels=3, feature_map_size=64,
                 embedding_size=50, img_size=64, key=None):
        ndf = feature_map_size
        power = int(math.log2(img_size))
        if key is None:
            key = jax.random.PRNGKey(0)
        keys = jax.random.split(key, power + 2)

        # nn.Embedding(n_categories, embedding_size)
        self.label_embedding = 0.02 * jax.random.normal(
            keys[0], (n_categories, embedding_size), dtype=jnp.float32)

        # Conv2d(prev, ndf*8 // 2**i, k=4, s=2, p=1, bias=False) stack.
        # Stored pre-reshaped as (KH*KW*Cin, Cout) bf16 matmul operands that
        # match the im2col layout (kh-major, kw, then channels innermost).
        self.conv_weights = []   # list of (kernel_size, (K, N) weight matrix)
        prev = channels + embedding_size
        for i in range(power - 1):
            out_ch = ndf * 8 // 2 ** i
            w = 0.02 * jax.random.normal(
                keys[i + 1], (4, 4, prev, out_ch), dtype=jnp.float32)
            self.conv_weights.append(
                (4, w.reshape(4 * 4 * prev, out_ch).astype(jnp.bfloat16)))
            prev = out_ch

        # output_conv: Conv2d(prev, 1, k=2, s=2, p=0) with bias.
        self.output_k = 2
        self.output_w = (0.02 * jax.random.normal(
            keys[power], (2, 2, prev, 1), dtype=jnp.float32)
        ).reshape(2 * 2 * prev)
        self.output_b = jnp.zeros((), dtype=jnp.float32)

        # jit the whole forward so the im2col / concat / pad glue fuses.
        self._forward = jax.jit(self._forward_impl)

    def _forward_impl(self, x_nchw, label):
        B = x_nchw.shape[0]
        x = jnp.transpose(x_nchw, (0, 2, 3, 1)).astype(jnp.bfloat16)   # NHWC
        H, W = x.shape[1], x.shape[2]

        # label embedding -> (B, E) -> broadcast over spatial dims -> concat.
        emb = jnp.take(self.label_embedding, label, axis=0).astype(jnp.bfloat16)
        emb = jnp.broadcast_to(emb[:, None, None, :], (B, H, W, emb.shape[-1]))
        x = jnp.concatenate([x, emb], axis=-1)   # channels: [image | embedding]

        # main: (Conv k4 s2 p1, no bias) + LeakyReLU(0.2), fused per layer.
        for k, wm in self.conv_weights:
            cols, (b, oh, ow) = _im2col_stride2(x, k, pad=1)
            y = matmul_lrelu(cols, wm)                        # bf16 activations
            x = y.reshape(b, oh, ow, wm.shape[1])

        # output_conv (k2 s2 p0, bias) + flatten + sigmoid (fused VPU kernel).
        cols, (b, oh, ow) = _im2col_stride2(x, self.output_k, pad=0)
        y = final_conv_sigmoid(cols, self.output_w, self.output_b)   # (B*oh*ow,)
        return y                                              # == torch flatten()

    def __call__(self, x_nchw, label):
        return self._forward(x_nchw, label)


if __name__ == "__main__":
    key = jax.random.PRNGKey(0)
    k_params, k_x, k_lbl = jax.random.split(key, 3)

    n_categories = 5
    batch, channels, img_size = 2, 3, 16
    disc = Discriminator(n_categories=n_categories, channels=channels,
                         feature_map_size=8, embedding_size=6,
                         img_size=img_size, key=k_params)

    x = jax.random.normal(k_x, (batch, channels, img_size, img_size),
                          dtype=jnp.float32)
    label = jax.random.randint(k_lbl, (batch,), 0, n_categories)

    out = disc(x, label)
    jax.block_until_ready(out)
    assert out.shape == (batch,), out.shape
    assert bool(jnp.all(jnp.isfinite(out)))
    assert bool(jnp.all((out >= 0.0) & (out <= 1.0)))
    print("KERNEL_OK")
</pallas_src>

<mosaic_0001>
module attributes {stable_mosaic.version = 11 : i64} {
  func.func @_matmul_lrelu_kernel(%arg0: i32, %arg1: i32, %arg2: i32, %arg3: memref<128x256xbf16, #tpu.memory_space<vmem>>, %arg4: memref<256x128xbf16, #tpu.memory_space<vmem>>, %arg5: memref<128x128xbf16, #tpu.memory_space<vmem>>, %arg6: memref<128x128xf32, #tpu.memory_space<vmem>>) attributes {dimension_semantics = [#tpu.dimension_semantics<parallel>, #tpu.dimension_semantics<parallel>, #tpu.dimension_semantics<arbitrary>], iteration_bounds = array<i64: 1, 1, 1>, scalar_prefetch = 0 : i64, scratch_operands = 1 : i64, tpu.core_type = #tpu.core_type<tc>, window_params = [{transform_indices = @transform_0, window_bounds = array<i64: 128, 256>}, {transform_indices = @transform_1, window_bounds = array<i64: 256, 128>}, {transform_indices = @transform_2, window_bounds = array<i64: 128, 128>}]} {
    %c0_i32 = arith.constant 0 : i32
    %0 = arith.cmpi eq, %arg2, %c0_i32 : i32
    %1 = arith.extui %0 : i1 to i32
    %c0_i32_0 = arith.constant 0 : i32
    %2 = arith.cmpi ne, %1, %c0_i32_0 : i32
    scf.if %2 {
      %cst_10 = arith.constant 0.000000e+00 : f32
      %12 = vector.broadcast %cst_10 : f32 to vector<128x128xf32>
      %c0_11 = arith.constant 0 : index
      %c0_12 = arith.constant 0 : index
      %13 = vector.load %arg6[%c0_11, %c0_12] : memref<128x128xf32, #tpu.memory_space<vmem>>, vector<128x128xf32>
      tpu.vector_store %arg6[%c0_11, %c0_12], %12 {strides = array<i32>} : memref<128x128xf32, #tpu.memory_space<vmem>>, vector<128x128xf32>,
    } else {
    }
    %c0 = arith.constant 0 : index
    %c0_1 = arith.constant 0 : index
    %3 = vector.load %arg6[%c0, %c0_1] : memref<128x128xf32, #tpu.memory_space<vmem>>, vector<128x128xf32>
    %c0_2 = arith.constant 0 : index
    %c0_3 = arith.constant 0 : index
    %4 = vector.load %arg3[%c0_2, %c0_3] : memref<128x256xbf16, #tpu.memory_space<vmem>>, vector<128x256xbf16>
    %c0_4 = arith.constant 0 : index
    %c0_5 = arith.constant 0 : index
    %5 = vector.load %arg4[%c0_4, %c0_5] : memref<256x128xbf16, #tpu.memory_space<vmem>>, vector<256x128xbf16>
    %cst = arith.constant dense<0.000000e+00> : vector<128x128xf32>
    %6 = tpu.matmul %4, %5, %cst {dimension_numbers = #tpu.dot_dimension_numbers<[1], [0], [0], [1], [0, 0, 1, 1], [], []>} : vector<128x256xbf16>, vector<256x128xbf16>, vector<128x128xf32> -> vector<128x128xf32>
    %7 = arith.addf %3, %6 : vector<128x128xf32>
    %c0_6 = arith.constant 0 : index
    %c0_7 = arith.constant 0 : index
    %8 = vector.load %arg6[%c0_6, %c0_7] : memref<128x128xf32, #tpu.memory_space<vmem>>, vector<128x128xf32>
    tpu.vector_store %arg6[%c0_6, %c0_7], %7 {strides = array<i32>} : memref<128x128xf32, #tpu.memory_space<vmem>>, vector<128x128xf32>,
    %c0_i32_8 = arith.constant 0 : i32
    %9 = arith.cmpi eq, %arg2, %c0_i32_8 : i32
    %10 = arith.extui %9 : i1 to i32
    %c0_i32_9 = arith.constant 0 : i32
    %11 = arith.cmpi ne, %10, %c0_i32_9 : i32
    scf.if %11 {
      %c0_10 = arith.constant 0 : index
      %c0_11 = arith.constant 0 : index
      %12 = vector.load %arg6[%c0_10, %c0_11] : memref<128x128xf32, #tpu.memory_space<vmem>>, vector<128x128xf32>
      %cst_12 = arith.constant 0.000000e+00 : f32
      %13 = vector.broadcast %cst_12 : f32 to vector<128x128xf32>
      %14 = arith.cmpf oge, %12, %13 : vector<128x128xf32>
      %cst_13 = arith.constant 2.000000e-01 : f32
      %15 = vector.broadcast %cst_13 : f32 to vector<128x128xf32>
      %16 = arith.mulf %15, %12 : vector<128x128xf32>
      %17 = arith.select %14, %12, %16 : vector<128x128xi1>, vector<128x128xf32>
      %18 = arith.truncf %17 : vector<128x128xf32> to vector<128x128xbf16>
      %c0_14 = arith.constant 0 : index
      %c0_15 = arith.constant 0 : index
      %19 = vector.load %arg5[%c0_14, %c0_15] : memref<128x128xbf16, #tpu.memory_space<vmem>>, vector<128x128xbf16>
      tpu.vector_store %arg5[%c0_14, %c0_15], %18 {strides = array<i32>} : memref<128x128xbf16, #tpu.memory_space<vmem>>, vector<128x128xbf16>,
    } else {
    }
    return
  }
  func.func @transform_0(%arg0: i32, %arg1: i32, %arg2: i32) -> (i32, i32) {
    %c0_i32 = arith.constant 0 : i32
    return %arg0, %arg2 : i32, i32
  }
  func.func @transform_1(%arg0: i32, %arg1: i32, %arg2: i32) -> (i32, i32) {
    %c0_i32 = arith.constant 0 : i32
    return %arg2, %arg1 : i32, i32
  }
  func.func @transform_2(%arg0: i32, %arg1: i32, %arg2: i32) -> (i32, i32) {
    %c0_i32 = arith.constant 0 : i32
    return %arg0, %arg1 : i32, i32
  }
}

module attributes {stable_mosaic.version = 11 : i64} {
  func.func @_matmul_lrelu_kernel(%arg0: i32, %arg1: i32, %arg2: i32, %arg3: memref<32x512xbf16, #tpu.memory_space<vmem>>, %arg4: memref<512x128xbf16, #tpu.memory_space<vmem>>, %arg5: memref<32x128xbf16, #tpu.memory_space<vmem>>, %arg6: memref<32x128xf32, #tpu.memory_space<vmem>>) attributes {dimension_semantics = [#tpu.dimension_semantics<parallel>, #tpu.dimension_semantics<parallel>, #tpu.dimension_semantics<arbitrary>], iteration_bounds = array<i64: 1, 1, 2>, scalar_prefetch = 0 : i64, scratch_operands = 1 : i64, tpu.core_type = #tpu.core_type<tc>, window_params = [{transform_indices = @transform_0, window_bounds = array<i64: 32, 512>}, {transform_indices = @transform_1, window_bounds = array<i64: 512, 128>}, {transform_indices = @transform_2, window_bounds = array<i64: 32, 128>}]} {
    %c0_i32 = arith.constant 0 : i32
    %0 = arith.cmpi eq, %arg2, %c0_i32 : i32
    %1 = arith.extui %0 : i1 to i32
    %c0_i32_0 = arith.constant 0 : i32
    %2 = arith.cmpi ne, %1, %c0_i32_0 : i32
    scf.if %2 {
      %cst_9 = arith.constant 0.000000e+00 : f32
      %12 = vector.broadcast %cst_9 : f32 to vector<32x128xf32>
      %c0_10 = arith.constant 0 : index
      %c0_11 = arith.constant 0 : index
      %13 = vector.load %arg6[%c0_10, %c0_11] : memref<32x128xf32, #tpu.memory_space<vmem>>, vector<32x128xf32>
      tpu.vector_store %arg6[%c0_10, %c0_11], %12 {strides = array<i32>} : memref<32x128xf32, #tpu.memory_space<vmem>>, vector<32x128xf32>,
    } else {
    }
    %c0 = arith.constant 0 : index
    %c0_1 = arith.constant 0 : index
    %3 = vector.load %arg6[%c0, %c0_1] : memref<32x128xf32, #tpu.memory_space<vmem>>, vector<32x128xf32>
    %c0_2 = arith.constant 0 : index
    %c0_3 = arith.constant 0 : index
    %4 = vector.load %arg3[%c0_2, %c0_3] : memref<32x512xbf16, #tpu.memory_space<vmem>>, vector<32x512xbf16>
    %c0_4 = arith.constant 0 : index
    %c0_5 = arith.constant 0 : index
    %5 = vector.load %arg4[%c0_4, %c0_5] : memref<512x128xbf16, #tpu.memory_space<vmem>>, vector<512x128xbf16>
    %cst = arith.constant dense<0.000000e+00> : vector<32x128xf32>
    %6 = tpu.matmul %4, %5, %cst {dimension_numbers = #tpu.dot_dimension_numbers<[1], [0], [0], [1], [0, 0, 1, 1], [], []>} : vector<32x512xbf16>, vector<512x128xbf16>, vector<32x128xf32> -> vector<32x128xf32>
    %7 = arith.addf %3, %6 : vector<32x128xf32>
    %c0_6 = arith.constant 0 : index
    %c0_7 = arith.constant 0 : index
    %8 = vector.load %arg6[%c0_6, %c0_7] : memref<32x128xf32, #tpu.memory_space<vmem>>, vector<32x128xf32>
    tpu.vector_store %arg6[%c0_6, %c0_7], %7 {strides = array<i32>} : memref<32x128xf32, #tpu.memory_space<vmem>>, vector<32x128xf32>,
    %c1_i32 = arith.constant 1 : i32
    %9 = arith.cmpi eq, %arg2, %c1_i32 : i32
    %10 = arith.extui %9 : i1 to i32
    %c0_i32_8 = arith.constant 0 : i32
    %11 = arith.cmpi ne, %10, %c0_i32_8 : i32
    scf.if %11 {
      %c0_9 = arith.constant 0 : index
      %c0_10 = arith.constant 0 : index
      %12 = vector.load %arg6[%c0_9, %c0_10] : memref<32x128xf32, #tpu.memory_space<vmem>>, vector<32x128xf32>
      %cst_11 = arith.constant 0.000000e+00 : f32
      %13 = vector.broadcast %cst_11 : f32 to vector<32x128xf32>
      %14 = arith.cmpf oge, %12, %13 : vector<32x128xf32>
      %cst_12 = arith.constant 2.000000e-01 : f32
      %15 = vector.broadcast %cst_12 : f32 to vector<32x128xf32>
      %16 = arith.mulf %15, %12 : vector<32x128xf32>
      %17 = arith.select %14, %12, %16 : vector<32x128xi1>, vector<32x128xf32>
      %18 = arith.truncf %17 : vector<32x128xf32> to vector<32x128xbf16>
      %c0_13 = arith.constant 0 : index
      %c0_14 = arith.constant 0 : index
      %19 = vector.load %arg5[%c0_13, %c0_14] : memref<32x128xbf16, #tpu.memory_space<vmem>>, vector<32x128xbf16>
      tpu.vector_store %arg5[%c0_13, %c0_14], %18 {strides = array<i32>} : memref<32x128xbf16, #tpu.memory_space<vmem>>, vector<32x128xbf16>,
    } else {
    }
    return
  }
  func.func @transform_0(%arg0: i32, %arg1: i32, %arg2: i32) -> (i32, i32) {
    %c0_i32 = arith.constant 0 : i32
    return %arg0, %arg2 : i32, i32
  }
  func.func @transform_1(%arg0: i32, %arg1: i32, %arg2: i32) -> (i32, i32) {
    %c0_i32 = arith.constant 0 : i32
    return %arg2, %arg1 : i32, i32
  }
  func.func @transform_2(%arg0: i32, %arg1: i32, %arg2: i32) -> (i32, i32) {
    %c0_i32 = arith.constant 0 : i32
    return %arg0, %arg1 : i32, i32
  }
}

module attributes {stable_mosaic.version = 11 : i64} {
  func.func @_matmul_lrelu_kernel(%arg0: i32, %arg1: i32, %arg2: i32, %arg3: memref<16x512xbf16, #tpu.memory_space<vmem>>, %arg4: memref<512x128xbf16, #tpu.memory_space<vmem>>, %arg5: memref<16x128xbf16, #tpu.memory_space<vmem>>, %arg6: memref<16x128xf32, #tpu.memory_space<vmem>>) attributes {dimension_semantics = [#tpu.dimension_semantics<parallel>, #tpu.dimension_semantics<parallel>, #tpu.dimension_semantics<arbitrary>], iteration_bounds = array<i64: 1, 1, 1>, scalar_prefetch = 0 : i64, scratch_operands = 1 : i64, tpu.core_type = #tpu.core_type<tc>, window_params = [{transform_indices = @transform_0, window_bounds = array<i64: 16, 512>}, {transform_indices = @transform_1, window_bounds = array<i64: 512, 128>}, {transform_indices = @transform_2, window_bounds = array<i64: 16, 128>}]} {
    %c0_i32 = arith.constant 0 : i32
    %0 = arith.cmpi eq, %arg2, %c0_i32 : i32
    %1 = arith.extui %0 : i1 to i32
    %c0_i32_0 = arith.constant 0 : i32
    %2 = arith.cmpi ne, %1, %c0_i32_0 : i32
    scf.if %2 {
      %cst_10 = arith.constant 0.000000e+00 : f32
      %12 = vector.broadcast %cst_10 : f32 to vector<16x128xf32>
      %c0_11 = arith.constant 0 : index
      %c0_12 = arith.constant 0 : index
      %13 = vector.load %arg6[%c0_11, %c0_12] : memref<16x128xf32, #tpu.memory_space<vmem>>, vector<16x128xf32>
      tpu.vector_store %arg6[%c0_11, %c0_12], %12 {strides = array<i32>} : memref<16x128xf32, #tpu.memory_space<vmem>>, vector<16x128xf32>,
    } else {
    }
    %c0 = arith.constant 0 : index
    %c0_1 = arith.constant 0 : index
    %3 = vector.load %arg6[%c0, %c0_1] : memref<16x128xf32, #tpu.memory_space<vmem>>, vector<16x128xf32>
    %c0_2 = arith.constant 0 : index
    %c0_3 = arith.constant 0 : index
    %4 = vector.load %arg3[%c0_2, %c0_3] : memref<16x512xbf16, #tpu.memory_space<vmem>>, vector<16x512xbf16>
    %c0_4 = arith.constant 0 : index
    %c0_5 = arith.constant 0 : index
    %5 = vector.load %arg4[%c0_4, %c0_5] : memref<512x128xbf16, #tpu.memory_space<vmem>>, vector<512x128xbf16>
    %cst = arith.constant dense<0.000000e+00> : vector<16x128xf32>
    %6 = tpu.matmul %4, %5, %cst {dimension_numbers = #tpu.dot_dimension_numbers<[1], [0], [0], [1], [0, 0, 1, 1], [], []>} : vector<16x512xbf16>, vector<512x128xbf16>, vector<16x128xf32> -> vector<16x128xf32>
    %7 = arith.addf %3, %6 : vector<16x128xf32>
    %c0_6 = arith.constant 0 : index
    %c0_7 = arith.constant 0 : index
    %8 = vector.load %arg6[%c0_6, %c0_7] : memref<16x128xf32, #tpu.memory_space<vmem>>, vector<16x128xf32>
    tpu.vector_store %arg6[%c0_6, %c0_7], %7 {strides = array<i32>} : memref<16x128xf32, #tpu.memory_space<vmem>>, vector<16x128xf32>,
    %c0_i32_8 = arith.constant 0 : i32
    %9 = arith.cmpi eq, %arg2, %c0_i32_8 : i32
    %10 = arith.extui %9 : i1 to i32
    %c0_i32_9 = arith.constant 0 : i32
    %11 = arith.cmpi ne, %10, %c0_i32_9 : i32
    scf.if %11 {
      %c0_10 = arith.constant 0 : index
      %c0_11 = arith.constant 0 : index
      %12 = vector.load %arg6[%c0_10, %c0_11] : memref<16x128xf32, #tpu.memory_space<vmem>>, vector<16x128xf32>
      %cst_12 = arith.constant 0.000000e+00 : f32
      %13 = vector.broadcast %cst_12 : f32 to vector<16x128xf32>
      %14 = arith.cmpf oge, %12, %13 : vector<16x128xf32>
      %cst_13 = arith.constant 2.000000e-01 : f32
      %15 = vector.broadcast %cst_13 : f32 to vector<16x128xf32>
      %16 = arith.mulf %15, %12 : vector<16x128xf32>
      %17 = arith.select %14, %12, %16 : vector<16x128xi1>, vector<16x128xf32>
      %18 = arith.truncf %17 : vector<16x128xf32> to vector<16x128xbf16>
      %c0_14 = arith.constant 0 : index
      %c0_15 = arith.constant 0 : index
      %19 = vector.load %arg5[%c0_14, %c0_15] : memref<16x128xbf16, #tpu.memory_space<vmem>>, vector<16x128xbf16>
      tpu.vector_store %arg5[%c0_14, %c0_15], %18 {strides = array<i32>} : memref<16x128xbf16, #tpu.memory_space<vmem>>, vector<16x128xbf16>,
    } else {
    }
    return
  }
  func.func @transform_0(%arg0: i32, %arg1: i32, %arg2: i32) -> (i32, i32) {
    %c0_i32 = arith.constant 0 : i32
    return %arg0, %arg2 : i32, i32
  }
  func.func @transform_1(%arg0: i32, %arg1: i32, %arg2: i32) -> (i32, i32) {
    %c0_i32 = arith.constant 0 : i32
    return %arg2, %arg1 : i32, i32
  }
  func.func @transform_2(%arg0: i32, %arg1: i32, %arg2: i32) -> (i32, i32) {
    %c0_i32 = arith.constant 0 : i32
    return %arg0, %arg1 : i32, i32
  }
}

module attributes {stable_mosaic.version = 11 : i64} {
  func.func @_final_conv_kernel(%arg0: memref<8x128xf32, #tpu.memory_space<vmem>>, %arg1: memref<1x128xf32, #tpu.memory_space<vmem>>, %arg2: memref<1xf32, #tpu.memory_space<smem>>, %arg3: memref<8x1xf32, #tpu.memory_space<vmem>>) attributes {dimension_semantics = [], scalar_prefetch = 0 : i64, scratch_operands = 0 : i64, tpu.core_type = #tpu.core_type<tc>} {
    %c0 = arith.constant 0 : index
    %0 = memref.load %arg2[%c0] : memref<1xf32, #tpu.memory_space<smem>>
    %c0_0 = arith.constant 0 : index
    %c0_1 = arith.constant 0 : index
    %1 = vector.load %arg0[%c0_0, %c0_1] : memref<8x128xf32, #tpu.memory_space<vmem>>, vector<8x128xf32>
    %c0_2 = arith.constant 0 : index
    %c0_3 = arith.constant 0 : index
    %2 = vector.load %arg1[%c0_2, %c0_3] : memref<1x128xf32, #tpu.memory_space<vmem>>, vector<1x128xf32>
    %3 = vector.broadcast %2 : vector<1x128xf32> to vector<8x128xf32>
    %4 = arith.mulf %1, %3 : vector<8x128xf32>
    %cst = arith.constant dense<0.000000e+00> : vector<8xf32>
    %5 = vector.multi_reduction <add>, %4, %cst [1] : vector<8x128xf32> to vector<8xf32>
    %6 = vector.shape_cast %5 : vector<8xf32> to vector<8x1xf32>
    %7 = vector.broadcast %0 : f32 to vector<8x1xf32>
    %8 = arith.addf %6, %7 : vector<8x1xf32>
    %9 = math.absf %8 : vector<8x1xf32>
    %cst_4 = arith.constant 0.000000e+00 : f32
    %10 = vector.broadcast %cst_4 : f32 to vector<8x1xf32>
    %11 = arith.subf %10, %9 : vector<8x1xf32>
    %12 = math.exp %11 : vector<8x1xf32>
    %cst_5 = arith.constant 0.000000e+00 : f32
    %13 = vector.broadcast %cst_5 : f32 to vector<8x1xf32>
    %14 = arith.cmpf oge, %8, %13 : vector<8x1xf32>
    %cst_6 = arith.constant 1.000000e+00 : f32
    %15 = vector.broadcast %cst_6 : f32 to vector<8x1xf32>
    %16 = arith.addf %15, %12 : vector<8x1xf32>
    %cst_7 = arith.constant 1.000000e+00 : f32
    %17 = vector.broadcast %cst_7 : f32 to vector<8x1xf32>
    %18 = arith.divf %17, %16 : vector<8x1xf32>
    %cst_8 = arith.constant 1.000000e+00 : f32
    %19 = vector.broadcast %cst_8 : f32 to vector<8x1xf32>
    %20 = arith.addf %19, %12 : vector<8x1xf32>
    %21 = arith.divf %12, %20 : vector<8x1xf32>
    %22 = arith.select %14, %18, %21 : vector<8x1xi1>, vector<8x1xf32>
    %c0_9 = arith.constant 0 : index
    %c0_10 = arith.constant 0 : index
    %23 = vector.load %arg3[%c0_9, %c0_10] : memref<8x1xf32, #tpu.memory_space<vmem>>, vector<8x1xf32>
    tpu.vector_store %arg3[%c0_9, %c0_10], %22 {strides = array<i32>} : memref<8x1xf32, #tpu.memory_space<vmem>>, vector<8x1xf32>,
    return
  }
}

</mosaic_0001>

<llo_original>
// kernel: _forward_impl.4
$region0: #{_forward_impl.4}
  #allocation0 [shape = 'u32[]', space=smem, size = 0x4, offset = 0x4, fixed_abs, tag = 'smem constant byte address 0x4 - core index']
  #allocation1 [shape = 'u32[144,128]{1,0:T(1,128)}', space=vmem, size = 0x12000, scoped, tag = 'internal scratch']
  #allocation2 [shape = 'f32[128,128]{1,0:T(8,128)}', space=vmem, size = 0x10000, scoped, tag = 'scratch operand']
  %s0 = inlined_call_operand.hbm [shape: bf16[128,256], index: 0, kind: input, shape index: {}]
  %s1 = inlined_call_operand.hbm [shape: bf16[256,128], index: 1, kind: input, shape index: {}]
  %s2 = inlined_call_operand.hbm [shape: bf16[128,128], index: 2, kind: output, shape index: {}]
  %s3 = sld [smem:[#allocation0]]
  $region34: #{_forward_impl.4} parent=0
    _
  %s5 = ssub.s32 1, %s3
  %s6 = scalar_select 0, %s5, %s3
  $region1: #{_forward_impl.4} parent=0
    #allocation3 [shape = 'u8[65536]{0}', space=vmem, size = 0x10000, scoped, tag = 'input window, operand 0, single buffered']
    #allocation4 [shape = 's32[1]{0}', space=sflag, size = 0x4, scoped, tag = 'scoped memory for _forward_impl.4']
    #allocation5 [shape = 's32[1]{0}', space=sflag, size = 0x4, scoped, tag = 'scoped memory for _forward_impl.4']
    #allocation6 [shape = 'u8[65536]{0}', space=vmem, size = 0x10000, scoped, tag = 'input window, operand 1, single buffered']
    #allocation7 [shape = 's32[1]{0}', space=sflag, size = 0x4, scoped, tag = 'scoped memory for _forward_impl.4']
    #allocation8 [shape = 'u8[32768]{0}', space=vmem, size = 0x8000, scoped, tag = 'output window, operand 0, single buffered']
    %7 = vsyncpa [#allocation4], 0
    %8 = vsyncpa [#allocation7], 0
    %9 = vsyncpa [#allocation5], 0
    // Predicated region
    $region2: #{_forward_impl.4} parent=1 // pred_check
      _
    $region3: #{_forward_impl.4} parent=1 // pred_check_branch
      %11 = sbr.rel (0) target = $region5
    $region4: #{_forward_impl.4} parent=1 // pred_region
      %s13 = ssub.s32 2048, 2048
      %14 = vsyncadd [#allocation4], %s13
      %s15 = sshll.u32 [#allocation3], 4
      %s16 = int_to_ptr.vmem [resolvable:$true] %s15
      %21 = dma.hbm_to_vmem [thread:$0]  %s0, 2048, %s16, [#allocation4], 128, 128, 8
    $region5: #{_forward_impl.4} parent=1 // pred_fallthru
      _
    // Predicated region
    $region6: #{_forward_impl.4} parent=1 // pred_check
      _
    $region7: #{_forward_impl.4} parent=1 // pred_check_branch
      %23 = sbr.rel (0) target = $region9
    $region8: #{_forward_impl.4} parent=1 // pred_region
      %s25 = ssub.s32 2048, 2048
      %26 = vsyncadd [#allocation7], %s25
      %s27 = sshll.u32 [#allocation6], 4
      %s28 = int_to_ptr.vmem [resolvable:$true] %s27
      %33 = dma.hbm_to_vmem [thread:$0]  %s1, 2048, %s28, [#allocation7], 64, 64, 4
    $region9: #{_forward_impl.4} parent=1 // pred_fallthru
      _
    // Predicated region
    $region10: #{_forward_impl.4} parent=1 // pred_check
      _
    $region11: #{_forward_impl.4} parent=1 // pred_check_branch
      %35 = sbr.rel (0) target = $region13
    $region12: #{_forward_impl.4} parent=1 // pred_region
      %36 = dma.done [#allocation4], 2048
    $region13: #{_forward_impl.4} parent=1 // pred_fallthru
      _
    // Predicated region
    $region14: #{_forward_impl.4} parent=1 // pred_check
      _
    $region15: #{_forward_impl.4} parent=1 // pred_check_branch
      %38 = sbr.rel (0) target = $region17
    $region16: #{_forward_impl.4} parent=1 // pred_region
      %39 = dma.done [#allocation7], 2048
    $region17: #{_forward_impl.4} parent=1 // pred_fallthru
      _
    %p41 = scmp.eq.s32.totalorder 0, 0
    // Predicated region
    $region18: #{_forward_impl.4} parent=1 // pred_check
      %p42 = pneg %p41
    $region19: #{_forward_impl.4} parent=1 // pred_check_branch
      %44 = sbr.rel (%p42) target = $region21
    $region20: #{_forward_impl.4} parent=1 // pred_region
      %45 = vst [vmem:[#allocation2] sm:$0xff] 0.0
      %46 = vst [vmem:[#allocation2 + $0x8] sm:$0xff] 0.0
      %47 = vst [vmem:[#allocation2 + $0x10] sm:$0xff] 0.0
      %48 = vst [vmem:[#allocation2 + $0x18] sm:$0xff] 0.0
      %49 = vst [vmem:[#allocation2 + $0x20] sm:$0xff] 0.0
      %50 = vst [vmem:[#allocation2 + $0x28] sm:$0xff] 0.0
      %51 = vst [vmem:[#allocation2 + $0x30] sm:$0xff] 0.0
      %52 = vst [vmem:[#allocation2 + $0x38] sm:$0xff] 0.0
      %53 = vst [vmem:[#allocation2 + $0x40] sm:$0xff] 0.0
      %54 = vst [vmem:[#allocation2 + $0x48] sm:$0xff] 0.0
      %55 = vst [vmem:[#allocation2 + $0x50] sm:$0xff] 0.0
      %56 = vst [vmem:[#allocation2 + $0x58] sm:$0xff] 0.0
      %57 = vst [vmem:[#allocation2 + $0x60] sm:$0xff] 0.0
      %58 = vst [vmem:[#allocation2 + $0x68] sm:$0xff] 0.0
      %59 = vst [vmem:[#allocation2 + $0x70] sm:$0xff] 0.0
      %60 = vst [vmem:[#allocation2 + $0x78] sm:$0xff] 0.0
    $region21: #{_forward_impl.4} parent=1 // pred_fallthru
      _
    %v61 = vld [vmem:[#allocation2] sm:$0xff]
    %v62 = vld [vmem:[#allocation2 + $0x8] sm:$0xff]
    %v63 = vld [vmem:[#allocation2 + $0x10] sm:$0xff]
    %v64 = vld [vmem:[#allocation2 + $0x18] sm:$0xff]
    %v65 = vld [vmem:[#allocation2 + $0x20] sm:$0xff]
    %v66 = vld [vmem:[#allocation2 + $0x28] sm:$0xff]
    %v67 = vld [vmem:[#allocation2 + $0x30] sm:$0xff]
    %v68 = vld [vmem:[#allocation2 + $0x38] sm:$0xff]
    %v69 = vld [vmem:[#allocation2 + $0x40] sm:$0xff]
    %v70 = vld [vmem:[#allocation2 + $0x48] sm:$0xff]
    %v71 = vld [vmem:[#allocation2 + $0x50] sm:$0xff]
    %v72 = vld [vmem:[#allocation2 + $0x58] sm:$0xff]
    %v73 = vld [vmem:[#allocation2 + $0x60] sm:$0xff]
    %v74 = vld [vmem:[#allocation2 + $0x68] sm:$0xff]
    %v75 = vld [vmem:[#allocation2 + $0x70] sm:$0xff]
    %v76 = vld [vmem:[#allocation2 + $0x78] sm:$0xff]
    %v77 = vld [vmem:[#allocation3] sm:$0xff]
    %v78 = vld [vmem:[#allocation3 + $0x8] sm:$0xff]
    %v79 = vld [vmem:[#allocation3 + $0x10] sm:$0xff]
    %v80 = vld [vmem:[#allocation3 + $0x18] sm:$0xff]
    %v81 = vld [vmem:[#allocation3 + $0x20] sm:$0xff]
    %v82 = vld [vmem:[#allocation3 + $0x28] sm:$0xff]
    %v83 = vld [vmem:[#allocation3 + $0x30] sm:$0xff]
    %v84 = vld [vmem:[#allocation3 + $0x38] sm:$0xff]
    %v85 = vld [vmem:[#allocation3 + $0x40] sm:$0xff]
    %v86 = vld [vmem:[#allocation3 + $0x48] sm:$0xff]
    %v87 = vld [vmem:[#allocation3 + $0x50] sm:$0xff]
    %v88 = vld [vmem:[#allocation3 + $0x58] sm:$0xff]
    %v89 = vld [vmem:[#allocation3 + $0x60] sm:$0xff]
    %v90 = vld [vmem:[#allocation3 + $0x68] sm:$0xff]
    %v91 = vld [vmem:[#allocation3 + $0x70] sm:$0xff]
    %v92 = vld [vmem:[#allocation3 + $0x78] sm:$0xff]
    %v93 = vld [vmem:[#allocation6] sm:$0xf]
    %v94 = vld [vmem:[#allocation6 + $0x4] sm:$0xf]
    %v95 = vld [vmem:[#allocation6 + $0x8] sm:$0xf]
    %v96 = vld [vmem:[#allocation6 + $0xc] sm:$0xf]
    %v97 = vld [vmem:[#allocation6 + $0x10] sm:$0xf]
    %v98 = vld [vmem:[#allocation6 + $0x14] sm:$0xf]
    %v99 = vld [vmem:[#allocation6 + $0x18] sm:$0xf]
    %v100 = vld [vmem:[#allocation6 + $0x1c] sm:$0xf]
    %v101 = vld [vmem:[#allocation6 + $0x20] sm:$0xf]
    %v102 = vld [vmem:[#allocation6 + $0x24] sm:$0xf]
    %v103 = vld [vmem:[#allocation6 + $0x28] sm:$0xf]
    %v104 = vld [vmem:[#allocation6 + $0x2c] sm:$0xf]
    %v105 = vld [vmem:[#allocation6 + $0x30] sm:$0xf]
    %v106 = vld [vmem:[#allocation6 + $0x34] sm:$0xf]
    %v107 = vld [vmem:[#allocation6 + $0x38] sm:$0xf]
    %v108 = vld [vmem:[#allocation6 + $0x3c] sm:$0xf]
    %v109 = vld [vmem:[#allocation6 + $0x40] sm:$0xf]
    %v110 = vld [vmem:[#allocation6 + $0x44] sm:$0xf]
    %v111 = vld [vmem:[#allocation6 + $0x48] sm:$0xf]
    %v112 = vld [vmem:[#allocation6 + $0x4c] sm:$0xf]
    %v113 = vld [vmem:[#allocation6 + $0x50] sm:$0xf]
    %v114 = vld [vmem:[#allocation6 + $0x54] sm:$0xf]
    %v115 = vld [vmem:[#allocation6 + $0x58] sm:$0xf]
    %v116 = vld [vmem:[#allocation6 + $0x5c] sm:$0xf]
    %v117 = vld [vmem:[#allocation6 + $0x60] sm:$0xf]
    %v118 = vld [vmem:[#allocation6 + $0x64] sm:$0xf]
    %v119 = vld [vmem:[#allocation6 + $0x68] sm:$0xf]
    %v120 = vld [vmem:[#allocation6 + $0x6c] sm:$0xf]
    %v121 = vld [vmem:[#allocation6 + $0x70] sm:$0xf]
    %v122 = vld [vmem:[#allocation6 + $0x74] sm:$0xf]
    %v123 = vld [vmem:[#allocation6 + $0x78] sm:$0xf]
    %v124 = vld [vmem:[#allocation6 + $0x7c] sm:$0xf]
    %v141 = vunpack.c.l.b16 %v77
    %v142 = vunpack.c.h.b16 %v77
    %v143 = vunpack.c.l.b16 %v78
    %v144 = vunpack.c.h.b16 %v78
    %v145 = vunpack.c.l.b16 %v79
    %v146 = vunpack.c.h.b16 %v79
    %v147 = vunpack.c.l.b16 %v80
    %v148 = vunpack.c.h.b16 %v80
    %v149 = vunpack.c.l.b16 %v81
    %v150 = vunpack.c.h.b16 %v81
    %v151 = vunpack.c.l.b16 %v82
    %v152 = vunpack.c.h.b16 %v82
    %v153 = vunpack.c.l.b16 %v83
    %v154 = vunpack.c.h.b16 %v83
    %v155 = vunpack.c.l.b16 %v84
    %v156 = vunpack.c.h.b16 %v84
    %v157 = vunpack.c.l.b16 %v85
    %v158 = vunpack.c.h.b16 %v85
    %v159 = vunpack.c.l.b16 %v86
    %v160 = vunpack.c.h.b16 %v86
    %v161 = vunpack.c.l.b16 %v87
    %v162 = vunpack.c.h.b16 %v87
    %v163 = vunpack.c.l.b16 %v88
    %v164 = vunpack.c.h.b16 %v88
    %v165 = vunpack.c.l.b16 %v89
    %v166 = vunpack.c.h.b16 %v89
    %v167 = vunpack.c.l.b16 %v90
    %v168 = vunpack.c.h.b16 %v90
    %v169 = vunpack.c.l.b16 %v91
    %v170 = vunpack.c.h.b16 %v91
    %v171 = vunpack.c.l.b16 %v92
    %v172 = vunpack.c.h.b16 %v92
    %v173 = vpack.c.b16 %v143, %v141
    %v174 = vpack.c.b16 %v144, %v142
    %v175 = vpack.c.b16 %v147, %v145
    %v176 = vpack.c.b16 %v148, %v146
    %v177 = vpack.c.b16 %v151, %v149
    %v178 = vpack.c.b16 %v152, %v150
    %v179 = vpack.c.b16 %v155, %v153
    %v180 = vpack.c.b16 %v156, %v154
    %v181 = vpack.c.b16 %v159, %v157
    %v182 = vpack.c.b16 %v160, %v158
    %v183 = vpack.c.b16 %v163, %v161
    %v184 = vpack.c.b16 %v164, %v162
    %v185 = vpack.c.b16 %v167, %v165
    %v186 = vpack.c.b16 %v168, %v166
    %v187 = vpack.c.b16 %v171, %v169
    %v188 = vpack.c.b16 %v172, %v170
    %v237 = vunpack.c.l.b16 %v93
    %v238 = vunpack.c.l.b16 %v94
    %v239 = vunpack.c.l.b16 %v95
    %v240 = vunpack.c.l.b16 %v96
    %v241 = vunpack.c.l.b16 %v97
    %v242 = vunpack.c.l.b16 %v98
    %v243 = vunpack.c.l.b16 %v99
    %v244 = vunpack.c.l.b16 %v100
    %v245 = vunpack.c.l.b16 %v101
    %v246 = vunpack.c.l.b16 %v102
    %v247 = vunpack.c.l.b16 %v103
    %v248 = vunpack.c.l.b16 %v104
    %v249 = vunpack.c.l.b16 %v105
    %v250 = vunpack.c.l.b16 %v106
    %v251 = vunpack.c.l.b16 %v107
    %v252 = vunpack.c.l.b16 %v108
    %v253 = vunpack.c.l.b16 %v109
    %v254 = vunpack.c.l.b16 %v110
    %v255 = vunpack.c.l.b16 %v111
    %v256 = vunpack.c.l.b16 %v112
    %v257 = vunpack.c.l.b16 %v113
    %v258 = vunpack.c.l.b16 %v114
    %v259 = vunpack.c.l.b16 %v115
    %v260 = vunpack.c.l.b16 %v116
    %v261 = vunpack.c.l.b16 %v117
    %v262 = vunpack.c.l.b16 %v118
    %v263 = vunpack.c.l.b16 %v119
    %v264 = vunpack.c.l.b16 %v120
    %v265 = vunpack.c.l.b16 %v121
    %v266 = vunpack.c.l.b16 %v122
    %v267 = vunpack.c.l.b16 %v123
    %v268 = vunpack.c.l.b16 %v124
    %v269 = vpack.c.b16 %v238, %v237
    %v270 = vpack.c.b16 %v240, %v239
    %v271 = vpack.c.b16 %v242, %v241
    %v272 = vpack.c.b16 %v244, %v243
    %v273 = vpack.c.b16 %v246, %v245
    %v274 = vpack.c.b16 %v248, %v247
    %v275 = vpack.c.b16 %v250, %v249
    %v276 = vpack.c.b16 %v252, %v251
    %v277 = vpack.c.b16 %v254, %v253
    %v278 = vpack.c.b16 %v256, %v255
    %v279 = vpack.c.b16 %v258, %v257
    %v280 = vpack.c.b16 %v260, %v259
    %v281 = vpack.c.b16 %v262, %v261
    %v282 = vpack.c.b16 %v264, %v263
    %v283 = vpack.c.b16 %v266, %v265
    %v284 = vpack.c.b16 %v268, %v267
    %301 = vmatprep.subr.bf16.mxu0 0
    %302 = vmatpush1.bf16.msra.mxu0 %v269
    %303 = vmatprep.subr.bf16.mxu0 0
    %304 = vmatpush1.bf16.msra.mxu0 %v270
    %305 = vmatprep.subr.bf16.mxu0 0
    %306 = vmatpush1.bf16.msra.mxu0 %v271
    %307 = vmatprep.subr.bf16.mxu0 0
    %308 = vmatpush1.bf16.msra.mxu0 %v272
    %309 = vmatprep.subr.bf16.mxu0 0
    %310 = vmatpush1.bf16.msra.mxu0 %v273
    %311 = vmatprep.subr.bf16.mxu0 0
    %312 = vmatpush1.bf16.msra.mxu0 %v274
    %313 = vmatprep.subr.bf16.mxu0 0
    %314 = vmatpush1.bf16.msra.mxu0 %v275
    %315 = vmatprep.subr.bf16.mxu0 0
    %316 = vmatpush1.bf16.msra.mxu0 %v276
    %317 = vmatprep.subr.bf16.mxu0 0
    %318 = vmatpush1.bf16.msra.mxu0 %v277
    %319 = vmatprep.subr.bf16.mxu0 0
    %320 = vmatpush1.bf16.msra.mxu0 %v278
    %321 = vmatprep.subr.bf16.mxu0 0
    %322 = vmatpush1.bf16.msra.mxu0 %v279
    %323 = vmatprep.subr.bf16.mxu0 0
    %324 = vmatpush1.bf16.msra.mxu0 %v280
    %325 = vmatprep.subr.bf16.mxu0 0
    %326 = vmatpush1.bf16.msra.mxu0 %v281
    %327 = vmatprep.subr.bf16.mxu0 0
    %328 = vmatpush1.bf16.msra.mxu0 %v282
    %329 = vmatprep.subr.bf16.mxu0 0
    %330 = vmatpush1.bf16.msra.mxu0 %v283
    %331 = vmatprep.subr.bf16.mxu0 0
    %332 = vmatpush1.bf16.msra.mxu0 %v284
    %333 = vmatprep.mubr.bf16.mxu0 %v174
    %334 = vmatmul.mubr.bf16.gmra.mrb[0].mxu0 %v173
    %v335 = vpop.f32.mrb[0].mxu0
    %v336 = vadd.f32 0.0, %v335
    %v337 = vpop.f32.mrb[0].mxu0
    %v338 = vpop.f32.mrb[0].mxu0
    %v339 = vadd.f32 0.0, %v338
    %v340 = vpop.f32.mrb[0].mxu0
    %341 = vmatprep.mubr.bf16.mxu0 %v176
    %342 = vmatmul.mubr.bf16.gmra.mrb[0].mxu0 %v175
    %v343 = vpop.f32.mrb[0].mxu0
    %v344 = vadd.f32 0.0, %v343
    %v345 = vpop.f32.mrb[0].mxu0
    %v346 = vpop.f32.mrb[0].mxu0
    %v347 = vadd.f32 0.0, %v346
    %v348 = vpop.f32.mrb[0].mxu0
    %349 = vmatprep.mubr.bf16.mxu0 %v178
    %350 = vmatmul.mubr.bf16.gmra.mrb[0].mxu0 %v177
    %v351 = vpop.f32.mrb[0].mxu0
    %v352 = vadd.f32 0.0, %v351
    %v353 = vpop.f32.mrb[0].mxu0
    %v354 = vpop.f32.mrb[0].mxu0
    %v355 = vadd.f32 0.0, %v354
    %v356 = vpop.f32.mrb[0].mxu0
    %357 = vmatprep.mubr.bf16.mxu0 %v180
    %358 = vmatmul.mubr.bf16.gmra.mrb[0].mxu0 %v179
    %v359 = vpop.f32.mrb[0].mxu0
    %v360 = vadd.f32 0.0, %v359
    %v361 = vpop.f32.mrb[0].mxu0
    %v362 = vpop.f32.mrb[0].mxu0
    %v363 = vadd.f32 0.0, %v362
    %v364 = vpop.f32.mrb[0].mxu0
    %365 = vmatprep.mubr.bf16.mxu0 %v182
    %366 = vmatmul.mubr.bf16.gmra.mrb[0].mxu0 %v181
    %v367 = vpop.f32.mrb[0].mxu0
    %v368 = vadd.f32 0.0, %v367
    %v369 = vpop.f32.mrb[0].mxu0
    %v370 = vpop.f32.mrb[0].mxu0
    %v371 = vadd.f32 0.0, %v370
    %v372 = vpop.f32.mrb[0].mxu0
    %373 = vmatprep.mubr.bf16.mxu0 %v184
    %374 = vmatmul.mubr.bf16.gmra.mrb[0].mxu0 %v183
    %v375 = vpop.f32.mrb[0].mxu0
    %v376 = vadd.f32 0.0, %v375
    %v377 = vpop.f32.mrb[0].mxu0
    %v378 = vpop.f32.mrb[0].mxu0
    %v379 = vadd.f32 0.0, %v378
    %v380 = vpop.f32.mrb[0].mxu0
    %381 = vmatprep.mubr.bf16.mxu0 %v186
    %382 = vmatmul.mubr.bf16.gmra.mrb[0].mxu0 %v185
    %v383 = vpop.f32.mrb[0].mxu0
    %v384 = vadd.f32 0.0, %v383
    %v385 = vpop.f32.mrb[0].mxu0
    %v386 = vpop.f32.mrb[0].mxu0
    %v387 = vadd.f32 0.0, %v386
    %v388 = vpop.f32.mrb[0].mxu0
    %389 = vmatprep.mubr.bf16.mxu0 %v188
    %390 = vmatmul.mubr.bf16.gmra.mrb[0].mxu0 %v187
    %v391 = vpop.f32.mrb[0].mxu0
    %v392 = vadd.f32 0.0, %v391
    %v393 = vpop.f32.mrb[0].mxu0
    %v394 = vpop.f32.mrb[0].mxu0
    %v395 = vadd.f32 0.0, %v394
    %v396 = vpop.f32.mrb[0].mxu0
    %397 = vdwg.mxu0
    %v398 = vadd.f32 %v61, %v336
    %v399 = vadd.f32 %v62, %v339
    %v400 = vadd.f32 %v63, %v344
    %v401 = vadd.f32 %v64, %v347
    %v402 = vadd.f32 %v65, %v352
    %v403 = vadd.f32 %v66, %v355
    %v404 = vadd.f32 %v67, %v360
    %v405 = vadd.f32 %v68, %v363
    %v406 = vadd.f32 %v69, %v368
    %v407 = vadd.f32 %v70, %v371
    %v408 = vadd.f32 %v71, %v376
    %v409 = vadd.f32 %v72, %v379
    %v410 = vadd.f32 %v73, %v384
    %v411 = vadd.f32 %v74, %v387
    %v412 = vadd.f32 %v75, %v392
    %v413 = vadd.f32 %v76, %v395
    %414 = vst [vmem:[#allocation2] sm:$0xff] %v398
    %415 = vst [vmem:[#allocation2 + $0x8] sm:$0xff] %v399
    %416 = vst [vmem:[#allocation2 + $0x10] sm:$0xff] %v400
    %417 = vst [vmem:[#allocation2 + $0x18] sm:$0xff] %v401
    %418 = vst [vmem:[#allocation2 + $0x20] sm:$0xff] %v402
    %419 = vst [vmem:[#allocation2 + $0x28] sm:$0xff] %v403
    %420 = vst [vmem:[#allocation2 + $0x30] sm:$0xff] %v404
    %421 = vst [vmem:[#allocation2 + $0x38] sm:$0xff] %v405
    %422 = vst [vmem:[#allocation2 + $0x40] sm:$0xff] %v406
    %423 = vst [vmem:[#allocation2 + $0x48] sm:$0xff] %v407
    %424 = vst [vmem:[#allocation2 + $0x50] sm:$0xff] %v408
    %425 = vst [vmem:[#allocation2 + $0x58] sm:$0xff] %v409
    %426 = vst [vmem:[#allocation2 + $0x60] sm:$0xff] %v410
    %427 = vst [vmem:[#allocation2 + $0x68] sm:$0xff] %v411
    %428 = vst [vmem:[#allocation2 + $0x70] sm:$0xff] %v412
    %429 = vst [vmem:[#allocation2 + $0x78] sm:$0xff] %v413
    // Predicated region
    $region22: #{_forward_impl.4} parent=1 // pred_check
      %p430 = pneg %p41
    $region23: #{_forward_impl.4} parent=1 // pred_check_branch
      %432 = sbr.rel (%p430) target = $region25
    $region24: #{_forward_impl.4} parent=1 // pred_region
      %v433 = vld [vmem:[#allocation2] sm:$0xff]
      %v434 = vld [vmem:[#allocation2 + $0x8] sm:$0xff]
      %v435 = vld [vmem:[#allocation2 + $0x10] sm:$0xff]
      %v436 = vld [vmem:[#allocation2 + $0x18] sm:$0xff]
      %v437 = vld [vmem:[#allocation2 + $0x20] sm:$0xff]
      %v438 = vld [vmem:[#allocation2 + $0x28] sm:$0xff]
      %v439 = vld [vmem:[#allocation2 + $0x30] sm:$0xff]
      %v440 = vld [vmem:[#allocation2 + $0x38] sm:$0xff]
      %v441 = vld [vmem:[#allocation2 + $0x40] sm:$0xff]
      %v442 = vld [vmem:[#allocation2 + $0x48] sm:$0xff]
      %v443 = vld [vmem:[#allocation2 + $0x50] sm:$0xff]
      %v444 = vld [vmem:[#allocation2 + $0x58] sm:$0xff]
      %v445 = vld [vmem:[#allocation2 + $0x60] sm:$0xff]
      %v446 = vld [vmem:[#allocation2 + $0x68] sm:$0xff]
      %v447 = vld [vmem:[#allocation2 + $0x70] sm:$0xff]
      %v448 = vld [vmem:[#allocation2 + $0x78] sm:$0xff]
      %vm449 = vcmp.ge.f32.partialorder %v433, 0.0
      %vm450 = vcmp.ge.f32.partialorder %v434, 0.0
      %vm451 = vcmp.ge.f32.partialorder %v435, 0.0
      %vm452 = vcmp.ge.f32.partialorder %v436, 0.0
      %vm453 = vcmp.ge.f32.partialorder %v437, 0.0
      %vm454 = vcmp.ge.f32.partialorder %v438, 0.0
      %vm455 = vcmp.ge.f32.partialorder %v439, 0.0
      %vm456 = vcmp.ge.f32.partialorder %v440, 0.0
      %vm457 = vcmp.ge.f32.partialorder %v441, 0.0
      %vm458 = vcmp.ge.f32.partialorder %v442, 0.0
      %vm459 = vcmp.ge.f32.partialorder %v443, 0.0
      %vm460 = vcmp.ge.f32.partialorder %v444, 0.0
      %vm461 = vcmp.ge.f32.partialorder %v445, 0.0
      %vm462 = vcmp.ge.f32.partialorder %v446, 0.0
      %vm463 = vcmp.ge.f32.partialorder %v447, 0.0
      %vm464 = vcmp.ge.f32.partialorder %v448, 0.0
      %v465 = vmul.f32 %v433, 0.2
      %v466 = vmul.f32 %v434, 0.2
      %v467 = vmul.f32 %v435, 0.2
      %v468 = vmul.f32 %v436, 0.2
      %v469 = vmul.f32 %v437, 0.2
      %v470 = vmul.f32 %v438, 0.2
      %v471 = vmul.f32 %v439, 0.2
      %v472 = vmul.f32 %v440, 0.2
      %v473 = vmul.f32 %v441, 0.2
      %v474 = vmul.f32 %v442, 0.2
      %v475 = vmul.f32 %v443, 0.2
      %v476 = vmul.f32 %v444, 0.2
      %v477 = vmul.f32 %v445, 0.2
      %v478 = vmul.f32 %v446, 0.2
      %v479 = vmul.f32 %v447, 0.2
      %v480 = vmul.f32 %v448, 0.2
      %v481 = vsel %vm449, %v433, %v465
      %v482 = vsel %vm450, %v434, %v466
      %v483 = vsel %vm451, %v435, %v467
      %v484 = vsel %vm452, %v436, %v468
      %v485 = vsel %vm453, %v437, %v469
      %v486 = vsel %vm454, %v438, %v470
      %v487 = vsel %vm455, %v439, %v471
      %v488 = vsel %vm456, %v440, %v472
      %v489 = vsel %vm457, %v441, %v473
      %v490 = vsel %vm458, %v442, %v474
      %v491 = vsel %vm459, %v443, %v475
      %v492 = vsel %vm460, %v444, %v476
      %v493 = vsel %vm461, %v445, %v477
      %v494 = vsel %vm462, %v446, %v478
      %v495 = vsel %vm463, %v447, %v479
      %v496 = vsel %vm464, %v448, %v480
      %v497 = vpack.c.bf16 %v482, %v481
      %v498 = vpack.c.bf16 %v484, %v483
      %v499 = vpack.c.bf16 %v486, %v485
      %v500 = vpack.c.bf16 %v488, %v487
      %v501 = vpack.c.bf16 %v490, %v489
      %v502 = vpack.c.bf16 %v492, %v491
      %v503 = vpack.c.bf16 %v494, %v493
      %v504 = vpack.c.bf16 %v496, %v495
      %v513 = vunpack.c.l.b16 %v497
      %v514 = vunpack.c.h.b16 %v497
      %v515 = vunpack.c.l.b16 %v498
      %v516 = vunpack.c.h.b16 %v498
      %v517 = vunpack.c.l.b16 %v499
      %v518 = vunpack.c.h.b16 %v499
      %v519 = vunpack.c.l.b16 %v500
      %v520 = vunpack.c.h.b16 %v500
      %v521 = vunpack.c.l.b16 %v501
      %v522 = vunpack.c.h.b16 %v501
      %v523 = vunpack.c.l.b16 %v502
      %v524 = vunpack.c.h.b16 %v502
      %v525 = vunpack.c.l.b16 %v503
      %v526 = vunpack.c.h.b16 %v503
      %v527 = vunpack.c.l.b16 %v504
      %v528 = vunpack.c.h.b16 %v504
      %v529 = vpack.c.b16 %v513, %v513
      %v530 = vpack.c.b16 %v514, %v514
      %v531 = vpack.c.b16 %v515, %v515
      %v532 = vpack.c.b16 %v516, %v516
      %v533 = vpack.c.b16 %v517, %v517
      %v534 = vpack.c.b16 %v518, %v518
      %v535 = vpack.c.b16 %v519, %v519
      %v536 = vpack.c.b16 %v520, %v520
      %v537 = vpack.c.b16 %v521, %v521
      %v538 = vpack.c.b16 %v522, %v522
      %v539 = vpack.c.b16 %v523, %v523
      %v540 = vpack.c.b16 %v524, %v524
      %v541 = vpack.c.b16 %v525, %v525
      %v542 = vpack.c.b16 %v526, %v526
      %v543 = vpack.c.b16 %v527, %v527
      %v544 = vpack.c.b16 %v528, %v528
      %561 = vst [vmem:[#allocation8] sm:$0xf] %v529
      %562 = vst [vmem:[#allocation8 + $0x4] sm:$0xf] %v530
      %563 = vst [vmem:[#allocation8 + $0x8] sm:$0xf] %v531
      %564 = vst [vmem:[#allocation8 + $0xc] sm:$0xf] %v532
      %565 = vst [vmem:[#allocation8 + $0x10] sm:$0xf] %v533
      %566 = vst [vmem:[#allocation8 + $0x14] sm:$0xf] %v534
      %567 = vst [vmem:[#allocation8 + $0x18] sm:$0xf] %v535
      %568 = vst [vmem:[#allocation8 + $0x1c] sm:$0xf] %v536
      %569 = vst [vmem:[#allocation8 + $0x20] sm:$0xf] %v537
      %570 = vst [vmem:[#allocation8 + $0x24] sm:$0xf] %v538
      %571 = vst [vmem:[#allocation8 + $0x28] sm:$0xf] %v539
      %572 = vst [vmem:[#allocation8 + $0x2c] sm:$0xf] %v540
      %573 = vst [vmem:[#allocation8 + $0x30] sm:$0xf] %v541
      %574 = vst [vmem:[#allocation8 + $0x34] sm:$0xf] %v542
      %575 = vst [vmem:[#allocation8 + $0x38] sm:$0xf] %v543
      %576 = vst [vmem:[#allocation8 + $0x3c] sm:$0xf] %v544
    $region25: #{_forward_impl.4} parent=1 // pred_fallthru
      _
    // Predicated region
    $region26: #{_forward_impl.4} parent=1 // pred_check
      _
    $region27: #{_forward_impl.4} parent=1 // pred_check_branch
      %578 = sbr.rel (0) target = $region29
    $region28: #{_forward_impl.4} parent=1 // pred_region
      %s580 = ssub.s32 1024, 1024
      %581 = vsyncadd [#allocation5], %s580
      %s582 = sshll.u32 [#allocation8], 4
      %s583 = int_to_ptr.vmem [resolvable:$true] %s582
      %588 = dma.vmem_to_hbm [thread:$0]  %s583, 1024, %s2, [#allocation5], 64, 64, 4
    $region29: #{_forward_impl.4} parent=1 // pred_fallthru
      _
    // Predicated region
    $region30: #{_forward_impl.4} parent=1 // pred_check
      _
    $region31: #{_forward_impl.4} parent=1 // pred_check_branch
      %590 = sbr.rel (0) target = $region33
    $region32: #{_forward_impl.4} parent=1 // pred_region
      %591 = dma.done [#allocation5], 1024
    $region33: #{_forward_impl.4} parent=1 // pred_fallthru
      _
    %592 = vsyncpa [#allocation4], 1
    %593 = vsyncpa [#allocation7], 1
    %594 = vsyncpa [#allocation5], 1

// kernel: _forward_impl.5
$region0: #{_forward_impl.5}
  #allocation0 [shape = 'u32[]', space=smem, size = 0x4, offset = 0x4, fixed_abs, tag = 'smem constant byte address 0x4 - core index']
  #allocation1 [shape = 'u32[144,128]{1,0:T(1,128)}', space=vmem, size = 0x12000, scoped, tag = 'internal scratch']
  #allocation2 [shape = 'f32[32,128]{1,0:T(8,128)}', space=vmem, size = 0x4000, scoped, tag = 'scratch operand']
  %s0 = inlined_call_operand.hbm [shape: bf16[32,1024], index: 0, kind: input, shape index: {}]
  %s1 = inlined_call_operand.hbm [shape: bf16[1024,128], index: 1, kind: input, shape index: {}]
  %s2 = inlined_call_operand.hbm [shape: bf16[32,128], index: 2, kind: output, shape index: {}]
  %s3 = sld [smem:[#allocation0]]
  $region57: #{_forward_impl.5} parent=0
    _
  %s5 = ssub.s32 1, %s3
  %s6 = scalar_select 0, %s5, %s3
  $region1: #{_forward_impl.5} parent=0
    #allocation3 [shape = 'u8[65536]{0}', space=vmem, size = 0x10000, scoped, tag = 'input window, operand 0']
    #allocation4 [shape = 's32[2]{0}', space=sflag, size = 0x8, scoped, tag = 'scoped memory for _forward_impl.5']
    #allocation5 [shape = 's32[2]{0}', space=sflag, size = 0x8, scoped, tag = 'scoped memory for _forward_impl.5']
    #allocation6 [shape = 'u8[262144]{0}', space=vmem, size = 0x40000, scoped, tag = 'input window, operand 1']
    #allocation7 [shape = 's32[2]{0}', space=sflag, size = 0x8, scoped, tag = 'scoped memory for _forward_impl.5']
    #allocation8 [shape = 'u8[8192]{0}', space=vmem, size = 0x2000, scoped, tag = 'output window, operand 0, single buffered']
    %7 = vsyncpa [#allocation4], 0
    %s8 = scalar_lea.sflag [#allocation4], 1
    %9 = vsyncpa %s8, 0
    %10 = vsyncpa [#allocation7], 0
    %s11 = scalar_lea.sflag [#allocation7], 1
    %12 = vsyncpa %s11, 0
    %13 = vsyncpa [#allocation5], 0
    loop: start=0, step=1, limit=4
    $region2: #{_forward_impl.5} parent=1 // loop_pre_header
      _
    $region3: #{_forward_impl.5} parent=1 // loop_header
      %s15 = sphi 0, %s19
      %p16 = scmp.ge.s32.totalorder %s15, 4
      %s22 = sphi 0, %s41
      %s23 = sphi 0, %s37
      %s24 = sphi 0, %s33
      %s25 = sphi 0, %s22
      %s26 = sphi 0, %s23
      %s27 = sphi 0, %s24
      %s28 = sphi 0, %s25
      %s29 = sphi 0, %s26
      %s30 = sphi 0, %s27
      %s46 = sphi 0, %s48
      %s49 = sphi 0, %s46
      %s50 = sphi 0, %s49
      %s66 = sphi 0, %s50
      %s74 = sphi 0, %s76
      %s77 = sphi 0, %s74
      %s78 = sphi 0, %s77
      %s94 = sphi 0, %s78
      %s102 = sphi 0, %s104
      %s105 = sphi 0, %s102
      %s106 = sphi 0, %s105
      %s122 = sphi 0, %s106
    $region4: #{_forward_impl.5} parent=1 // loop_header_branch
      %18 = sbr.rel (%p16) target = $region8
    $region5: #{_forward_impl.5} parent=1 // loop_body
      %s20 = ssub.s32 %s15, 1
      %s21 = ssub.s32 %s15, 2
      %s31 = sadd.s32 1, %s24
      %p32 = scmp.ge.s32.totalorder %s31, 2
      %s33 = scalar_select %p32, 0, %s31
      %s34 = sadd.s32 1, %s23
      %s35 = scalar_select %p32, %s34, %s23
      %p36 = scmp.ge.s32.totalorder %s35, 1
      %s37 = scalar_select %p36, 0, %s35
      %s38 = sadd.s32 1, %s22
      %s39 = scalar_select %p36, %s38, %s22
      %p40 = scmp.ge.s32.totalorder %s39, 1
      %s41 = scalar_select %p40, 0, %s39
      %s42 = ssub.s32 %s22, %s41
      %s43 = ssub.s32 %s24, %s33
      %s44 = sor.u32 %s42, %s43
      %p45 = scmp.eq.s32.totalorder %s44, 0
      %s47 = sadd.s32 %s46, 1
      %s48 = scalar_select %p45, %s46, %s47
      %p51 = pneg %p45
      %p52 = scmp.eq.s32.totalorder %s15, 1
      %p53 = por %p51, %p52
      %p54 = scmp.ne.s32.totalorder %s46, %s49
      %p55 = scmp.eq.s32.totalorder %s15, 0
      %p56 = por %p54, %p55
      %p57 = scmp.ne.s32.totalorder %s46, %s49
      %p58 = scmp.eq.s32.totalorder %s20, 1
      %p59 = por %p57, %p58
      %p60 = scmp.ne.s32.totalorder %s49, %s50
      %p61 = scmp.eq.s32.totalorder %s20, 0
      %p62 = por %p60, %p61
      %p63 = scmp.ne.s32.totalorder %s49, %s50
      %p64 = scmp.eq.s32.totalorder %s21, 1
      %p65 = por %p63, %p64
      %p67 = scmp.ne.s32.totalorder %s50, %s66
      %p68 = scmp.eq.s32.totalorder %s21, 0
      %p69 = por %p67, %p68
      %s70 = ssub.s32 %s24, %s33
      %s71 = ssub.s32 %s23, %s37
      %s72 = sor.u32 %s70, %s71
      %p73 = scmp.eq.s32.totalorder %s72, 0
      %s75 = sadd.s32 %s74, 1
      %s76 = scalar_select %p73, %s74, %s75
      %p79 = pneg %p73
      %p80 = scmp.eq.s32.totalorder %s15, 1
      %p81 = por %p79, %p80
      %p82 = scmp.ne.s32.totalorder %s74, %s77
      %p83 = scmp.eq.s32.totalorder %s15, 0
      %p84 = por %p82, %p83
      %p85 = scmp.ne.s32.totalorder %s74, %s77
      %p86 = scmp.eq.s32.totalorder %s20, 1
      %p87 = por %p85, %p86
      %p88 = scmp.ne.s32.totalorder %s77, %s78
      %p89 = scmp.eq.s32.totalorder %s20, 0
      %p90 = por %p88, %p89
      %p91 = scmp.ne.s32.totalorder %s77, %s78
      %p92 = scmp.eq.s32.totalorder %s21, 1
      %p93 = por %p91, %p92
      %p95 = scmp.ne.s32.totalorder %s78, %s94
      %p96 = scmp.eq.s32.totalorder %s21, 0
      %p97 = por %p95, %p96
      %s98 = ssub.s32 %s22, %s41
      %s99 = ssub.s32 %s23, %s37
      %s100 = sor.u32 %s98, %s99
      %p101 = scmp.eq.s32.totalorder %s100, 0
      %s103 = sadd.s32 %s102, 1
      %s104 = scalar_select %p101, %s102, %s103
      %p107 = pneg %p101
      %p108 = scmp.eq.s32.totalorder %s15, 1
      %p109 = por %p107, %p108
      %p110 = scmp.ne.s32.totalorder %s102, %s105
      %p111 = scmp.eq.s32.totalorder %s15, 0
      %p112 = por %p110, %p111
      %p113 = scmp.ne.s32.totalorder %s102, %s105
      %p114 = scmp.eq.s32.totalorder %s20, 1
      %p115 = por %p113, %p114
      %p116 = scmp.ne.s32.totalorder %s105, %s106
      %p117 = scmp.eq.s32.totalorder %s20, 0
      %p118 = por %p116, %p117
      %p119 = scmp.ne.s32.totalorder %s105, %s106
      %p120 = scmp.eq.s32.totalorder %s21, 1
      %p121 = por %p119, %p120
      %p123 = scmp.ne.s32.totalorder %s106, %s122
      %p124 = scmp.eq.s32.totalorder %s21, 0
      %p125 = por %p123, %p124
      %p126 = scmp.le.s32.totalorder 1, %s15
      %p127 = scmp.lt.s32.totalorder %s15, 3
      %p128 = pnand %p126, %p127
      %p129 = pneg %p128
      // Predicated region
      $region9: #{_forward_impl.5} parent=5 // pred_check
        _
      $region10: #{_forward_impl.5} parent=5 // pred_check_branch
        %131 = sbr.rel (%p128) target = $region12
      $region11: #{_forward_impl.5} parent=5 // pred_region
        %s132 = ssub.s32 %s15, 1
      $region12: #{_forward_impl.5} parent=5 // pred_fallthru
        _
      %p133 = scmp.lt.s32.totalorder %s15, 2
      // Predicated region
      $region13: #{_forward_impl.5} parent=5 // pred_check
        %p134 = pneg %p133
      $region14: #{_forward_impl.5} parent=5 // pred_check_branch
        %136 = sbr.rel (%p134) target = $region16
      $region15: #{_forward_impl.5} parent=5 // pred_region
        // Predicated region
        $region17: #{_forward_impl.5} parent=15 // pred_check
          %p137 = pneg %p56
        $region18: #{_forward_impl.5} parent=15 // pred_check_branch
          %139 = sbr.rel (%p137) target = $region20
        $region19: #{_forward_impl.5} parent=15 // pred_region
          %s140 = sand.u32 %s46, 1
          %s141 = scalar_lea.sflag [#allocation4], %s140
          %s142 = sand.u32 %s46, 1
          %s143 = smul.addr %s142, 64
          %s144 = scalar_lea.vmem [#allocation3], %s143
          %s145 = smul.u32 4, %s22
          %s146 = smul.u32 4, %s24
          %s148 = ssub.s32 1024, 1024
          %149 = vsyncadd %s141, %s148
          %s150 = smul.addr %s145, 8
          %s151 = sadd.s32 %s146, %s150
          %s152 = smul.addr %s151, 64
          %s153 = scalar_lea.hbm %s0, %s152
          %s154 = sshll.u32 %s144, 4
          %s155 = int_to_ptr.vmem [resolvable:$true] %s154
          %160 = dma.hbm_to_vmem [thread:$0]  %s153, 1024, %s155, %s141, 512, 256, 16
        $region20: #{_forward_impl.5} parent=15 // pred_fallthru
          _
        // Predicated region
        $region21: #{_forward_impl.5} parent=15 // pred_check
          %p161 = pneg %p84
        $region22: #{_forward_impl.5} parent=15 // pred_check_branch
          %163 = sbr.rel (%p161) target = $region24
        $region23: #{_forward_impl.5} parent=15 // pred_region
          %s164 = sand.u32 %s74, 1
          %s165 = scalar_lea.sflag [#allocation7], %s164
          %s166 = sand.u32 %s74, 1
          %s167 = smul.addr %s166, 256
          %s168 = scalar_lea.vmem [#allocation6], %s167
          %s169 = smul.u32 64, %s24
          %s171 = ssub.s32 4096, 4096
          %172 = vsyncadd %s165, %s171
          %s173 = sadd.s32 %s23, %s169
          %s174 = smul.addr %s173, 64
          %s175 = scalar_lea.hbm %s1, %s174
          %s176 = sshll.u32 %s168, 4
          %s177 = int_to_ptr.vmem [resolvable:$true] %s176
          %182 = dma.hbm_to_vmem [thread:$0]  %s175, 4096, %s177, %s165, 64, 64, 4
        $region24: #{_forward_impl.5} parent=15 // pred_fallthru
          _
      $region16: #{_forward_impl.5} parent=5 // pred_fallthru
        _
      %p183 = scmp.le.s32.totalorder 1, %s15
      %p184 = scmp.lt.s32.totalorder %s15, 3
      %p185 = pnand %p183, %p184
      %p186 = pneg %p185
      // Predicated region
      $region25: #{_forward_impl.5} parent=5 // pred_check
        _
      $region26: #{_forward_impl.5} parent=5 // pred_check_branch
        %188 = sbr.rel (%p185) target = $region28
      $region27: #{_forward_impl.5} parent=5 // pred_region
        %s189 = ssub.s32 %s15, 1
        %s190 = sand.u32 %s49, 1
        %s191 = scalar_lea.sflag [#allocation4], %s190
        %s192 = sand.u32 %s49, 1
        %s193 = smul.addr %s192, 64
        %s194 = scalar_lea.vmem [#allocation3], %s193
        // Predicated region
        $region29: #{_forward_impl.5} parent=27 // pred_check
          %p195 = pneg %p62
        $region30: #{_forward_impl.5} parent=27 // pred_check_branch
          %197 = sbr.rel (%p195) target = $region32
        $region31: #{_forward_impl.5} parent=27 // pred_region
          %198 = dma.done %s191, 1024
        $region32: #{_forward_impl.5} parent=27 // pred_fallthru
          _
        %s199 = sand.u32 %s77, 1
        %s200 = scalar_lea.sflag [#allocation7], %s199
        %s201 = sand.u32 %s77, 1
        %s202 = smul.addr %s201, 256
        %s203 = scalar_lea.vmem [#allocation6], %s202
        // Predicated region
        $region33: #{_forward_impl.5} parent=27 // pred_check
          %p204 = pneg %p90
        $region34: #{_forward_impl.5} parent=27 // pred_check_branch
          %206 = sbr.rel (%p204) target = $region36
        $region35: #{_forward_impl.5} parent=27 // pred_region
          %207 = dma.done %s200, 4096
        $region36: #{_forward_impl.5} parent=27 // pred_fallthru
          _
        %s208 = sand.u32 %s49, 1
        %s209 = scalar_lea.sflag [#allocation4], %s208
        %s210 = sand.u32 %s49, 1
        %s211 = smul.addr %s210, 64
        %s212 = scalar_lea.vmem [#allocation3], %s211
        %p213 = pneg %p62
        %p214 = pneg %p59
        %s215 = sand.u32 %s77, 1
        %s216 = scalar_lea.sflag [#allocation7], %s215
        %s217 = sand.u32 %s77, 1
        %s218 = smul.addr %s217, 256
        %s219 = scalar_lea.vmem [#allocation6], %s218
        %p220 = pneg %p90
        %p221 = pneg %p87
        %p222 = pneg %p118
        %p223 = pneg %p115
        %s224 = smul.u32 4, %s25
        %s225 = smul.u32 4, %s27
        %s226 = smul.u32 64, %s27
        %s227 = smul.u32 4, %s25
        %p229 = scmp.eq.s32.totalorder %s27, 0
        // Predicated region
        $region37: #{_forward_impl.5} parent=27 // pred_check
          %p230 = pneg %p229
        $region38: #{_forward_impl.5} parent=27 // pred_check_branch
          %232 = sbr.rel (%p230) target = $region40
        $region39: #{_forward_impl.5} parent=27 // pred_region
          %233 = vst [vmem:[#allocation2] sm:$0xff] 0.0
          %234 = vst [vmem:[#allocation2 + $0x8] sm:$0xff] 0.0
          %235 = vst [vmem:[#allocation2 + $0x10] sm:$0xff] 0.0
          %236 = vst [vmem:[#allocation2 + $0x18] sm:$0xff] 0.0
        $region40: #{_forward_impl.5} parent=27 // pred_fallthru
          _
        %v237 = vld [vmem:[#allocation2] sm:$0xff]
        %v238 = vld [vmem:[#allocation2 + $0x8] sm:$0xff]
        %v239 = vld [vmem:[#allocation2 + $0x10] sm:$0xff]
        %v240 = vld [vmem:[#allocation2 + $0x18] sm:$0xff]
        %v241 = vld [vmem:[%s194] sm:$0xff]
        %v242 = vld [vmem:[%s194 + $0x8] sm:$0xff]
        %v243 = vld [vmem:[%s194 + $0x10] sm:$0xff]
        %v244 = vld [vmem:[%s194 + $0x18] sm:$0xff]
        %v245 = vld [vmem:[%s194 + $0x20] sm:$0xff]
        %v246 = vld [vmem:[%s194 + $0x28] sm:$0xff]
        %v247 = vld [vmem:[%s194 + $0x30] sm:$0xff]
        %v248 = vld [vmem:[%s194 + $0x38] sm:$0xff]
        %v249 = vld [vmem:[%s203] sm:$0xf]
        %v250 = vld [vmem:[%s203 + $0x4] sm:$0xf]
        %v251 = vld [vmem:[%s203 + $0x8] sm:$0xf]
        %v252 = vld [vmem:[%s203 + $0xc] sm:$0xf]
        %v253 = vld [vmem:[%s203 + $0x10] sm:$0xf]
        %v254 = vld [vmem:[%s203 + $0x14] sm:$0xf]
        %v255 = vld [vmem:[%s203 + $0x18] sm:$0xf]
        %v256 = vld [vmem:[%s203 + $0x1c] sm:$0xf]
        %v257 = vld [vmem:[%s203 + $0x20] sm:$0xf]
        %v258 = vld [vmem:[%s203 + $0x24] sm:$0xf]
        %v259 = vld [vmem:[%s203 + $0x28] sm:$0xf]
        %v260 = vld [vmem:[%s203 + $0x2c] sm:$0xf]
        %v261 = vld [vmem:[%s203 + $0x30] sm:$0xf]
        %v262 = vld [vmem:[%s203 + $0x34] sm:$0xf]
        %v263 = vld [vmem:[%s203 + $0x38] sm:$0xf]
        %v264 = vld [vmem:[%s203 + $0x3c] sm:$0xf]
        %v265 = vld [vmem:[%s203 + $0x40] sm:$0xf]
        %v266 = vld [vmem:[%s203 + $0x44] sm:$0xf]
        %v267 = vld [vmem:[%s203 + $0x48] sm:$0xf]
        %v268 = vld [vmem:[%s203 + $0x4c] sm:$0xf]
        %v269 = vld [vmem:[%s203 + $0x50] sm:$0xf]
        %v270 = vld [vmem:[%s203 + $0x54] sm:$0xf]
        %v271 = vld [vmem:[%s203 + $0x58] sm:$0xf]
        %v272 = vld [vmem:[%s203 + $0x5c] sm:$0xf]
        %v273 = vld [vmem:[%s203 + $0x60] sm:$0xf]
        %v274 = vld [vmem:[%s203 + $0x64] sm:$0xf]
        %v275 = vld [vmem:[%s203 + $0x68] sm:$0xf]
        %v276 = vld [vmem:[%s203 + $0x6c] sm:$0xf]
        %v277 = vld [vmem:[%s203 + $0x70] sm:$0xf]
        %v278 = vld [vmem:[%s203 + $0x74] sm:$0xf]
        %v279 = vld [vmem:[%s203 + $0x78] sm:$0xf]
        %v280 = vld [vmem:[%s203 + $0x7c] sm:$0xf]
        %v281 = vld [vmem:[%s203 + $0x80] sm:$0xf]
        %v282 = vld [vmem:[%s203 + $0x84] sm:$0xf]
        %v283 = vld [vmem:[%s203 + $0x88] sm:$0xf]
        %v284 = vld [vmem:[%s203 + $0x8c] sm:$0xf]
        %v285 = vld [vmem:[%s203 + $0x90] sm:$0xf]
        %v286 = vld [vmem:[%s203 + $0x94] sm:$0xf]
        %v287 = vld [vmem:[%s203 + $0x98] sm:$0xf]
        %v288 = vld [vmem:[%s203 + $0x9c] sm:$0xf]
        %v289 = vld [vmem:[%s203 + $0xa0] sm:$0xf]
        %v290 = vld [vmem:[%s203 + $0xa4] sm:$0xf]
        %v291 = vld [vmem:[%s203 + $0xa8] sm:$0xf]
        %v292 = vld [vmem:[%s203 + $0xac] sm:$0xf]
        %v293 = vld [vmem:[%s203 + $0xb0] sm:$0xf]
        %v294 = vld [vmem:[%s203 + $0xb4] sm:$0xf]
        %v295 = vld [vmem:[%s203 + $0xb8] sm:$0xf]
        %v296 = vld [vmem:[%s203 + $0xbc] sm:$0xf]
        %v297 = vld [vmem:[%s203 + $0xc0] sm:$0xf]
        %v298 = vld [vmem:[%s203 + $0xc4] sm:$0xf]
        %v299 = vld [vmem:[%s203 + $0xc8] sm:$0xf]
        %v300 = vld [vmem:[%s203 + $0xcc] sm:$0xf]
        %v301 = vld [vmem:[%s203 + $0xd0] sm:$0xf]
        %v302 = vld [vmem:[%s203 + $0xd4] sm:$0xf]
        %v303 = vld [vmem:[%s203 + $0xd8] sm:$0xf]
        %v304 = vld [vmem:[%s203 + $0xdc] sm:$0xf]
        %v305 = vld [vmem:[%s203 + $0xe0] sm:$0xf]
        %v306 = vld [vmem:[%s203 + $0xe4] sm:$0xf]
        %v307 = vld [vmem:[%s203 + $0xe8] sm:$0xf]
        %v308 = vld [vmem:[%s203 + $0xec] sm:$0xf]
        %v309 = vld [vmem:[%s203 + $0xf0] sm:$0xf]
        %v310 = vld [vmem:[%s203 + $0xf4] sm:$0xf]
        %v311 = vld [vmem:[%s203 + $0xf8] sm:$0xf]
        %v312 = vld [vmem:[%s203 + $0xfc] sm:$0xf]
        %v321 = vunpack.c.l.b16 %v241
        %v322 = vunpack.c.h.b16 %v241
        %v323 = vunpack.c.l.b16 %v242
        %v324 = vunpack.c.h.b16 %v242
        %v325 = vunpack.c.l.b16 %v243
        %v326 = vunpack.c.h.b16 %v243
        %v327 = vunpack.c.l.b16 %v244
        %v328 = vunpack.c.h.b16 %v244
        %v329 = vunpack.c.l.b16 %v245
        %v330 = vunpack.c.h.b16 %v245
        %v331 = vunpack.c.l.b16 %v246
        %v332 = vunpack.c.h.b16 %v246
        %v333 = vunpack.c.l.b16 %v247
        %v334 = vunpack.c.h.b16 %v247
        %v335 = vunpack.c.l.b16 %v248
        %v336 = vunpack.c.h.b16 %v248
        %v337 = vpack.c.b16 %v325, %v321
        %v338 = vpack.c.b16 %v326, %v322
        %v339 = vpack.c.b16 %v327, %v323
        %v340 = vpack.c.b16 %v328, %v324
        %v341 = vpack.c.b16 %v333, %v329
        %v342 = vpack.c.b16 %v334, %v330
        %v343 = vpack.c.b16 %v335, %v331
        %v344 = vpack.c.b16 %v336, %v332
        %v417 = vunpack.c.l.b16 %v249
        %v418 = vunpack.c.l.b16 %v250
        %v419 = vunpack.c.l.b16 %v251
        %v420 = vunpack.c.l.b16 %v252
        %v421 = vunpack.c.l.b16 %v253
        %v422 = vunpack.c.l.b16 %v254
        %v423 = vunpack.c.l.b16 %v255
        %v424 = vunpack.c.l.b16 %v256
        %v425 = vunpack.c.l.b16 %v257
        %v426 = vunpack.c.l.b16 %v258
        %v427 = vunpack.c.l.b16 %v259
        %v428 = vunpack.c.l.b16 %v260
        %v429 = vunpack.c.l.b16 %v261
        %v430 = vunpack.c.l.b16 %v262
        %v431 = vunpack.c.l.b16 %v263
        %v432 = vunpack.c.l.b16 %v264
        %v433 = vunpack.c.l.b16 %v265
        %v434 = vunpack.c.l.b16 %v266
        %v435 = vunpack.c.l.b16 %v267
        %v436 = vunpack.c.l.b16 %v268
        %v437 = vunpack.c.l.b16 %v269
        %v438 = vunpack.c.l.b16 %v270
        %v439 = vunpack.c.l.b16 %v271
        %v440 = vunpack.c.l.b16 %v272
        %v441 = vunpack.c.l.b16 %v273
        %v442 = vunpack.c.l.b16 %v274
        %v443 = vunpack.c.l.b16 %v275
        %v444 = vunpack.c.l.b16 %v276
        %v445 = vunpack.c.l.b16 %v277
        %v446 = vunpack.c.l.b16 %v278
        %v447 = vunpack.c.l.b16 %v279
        %v448 = vunpack.c.l.b16 %v280
        %v449 = vunpack.c.l.b16 %v281
        %v450 = vunpack.c.l.b16 %v282
        %v451 = vunpack.c.l.b16 %v283
        %v452 = vunpack.c.l.b16 %v284
        %v453 = vunpack.c.l.b16 %v285
        %v454 = vunpack.c.l.b16 %v286
        %v455 = vunpack.c.l.b16 %v287
        %v456 = vunpack.c.l.b16 %v288
        %v457 = vunpack.c.l.b16 %v289
        %v458 = vunpack.c.l.b16 %v290
        %v459 = vunpack.c.l.b16 %v291
        %v460 = vunpack.c.l.b16 %v292
        %v461 = vunpack.c.l.b16 %v293
        %v462 = vunpack.c.l.b16 %v294
        %v463 = vunpack.c.l.b16 %v295
        %v464 = vunpack.c.l.b16 %v296
        %v465 = vunpack.c.l.b16 %v297
        %v466 = vunpack.c.l.b16 %v298
        %v467 = vunpack.c.l.b16 %v299
        %v468 = vunpack.c.l.b16 %v300
        %v469 = vunpack.c.l.b16 %v301
        %v470 = vunpack.c.l.b16 %v302
        %v471 = vunpack.c.l.b16 %v303
        %v472 = vunpack.c.l.b16 %v304
        %v473 = vunpack.c.l.b16 %v305
        %v474 = vunpack.c.l.b16 %v306
        %v475 = vunpack.c.l.b16 %v307
        %v476 = vunpack.c.l.b16 %v308
        %v477 = vunpack.c.l.b16 %v309
        %v478 = vunpack.c.l.b16 %v310
        %v479 = vunpack.c.l.b16 %v311
        %v480 = vunpack.c.l.b16 %v312
        %v481 = vpack.c.b16 %v418, %v417
        %v482 = vpack.c.b16 %v420, %v419
        %v483 = vpack.c.b16 %v422, %v421
        %v484 = vpack.c.b16 %v424, %v423
        %v485 = vpack.c.b16 %v426, %v425
        %v486 = vpack.c.b16 %v428, %v427
        %v487 = vpack.c.b16 %v430, %v429
        %v488 = vpack.c.b16 %v432, %v431
        %v489 = vpack.c.b16 %v434, %v433
        %v490 = vpack.c.b16 %v436, %v435
        %v491 = vpack.c.b16 %v438, %v437
        %v492 = vpack.c.b16 %v440, %v439
        %v493 = vpack.c.b16 %v442, %v441
        %v494 = vpack.c.b16 %v444, %v443
        %v495 = vpack.c.b16 %v446, %v445
        %v496 = vpack.c.b16 %v448, %v447
        %v497 = vpack.c.b16 %v450, %v449
        %v498 = vpack.c.b16 %v452, %v451
        %v499 = vpack.c.b16 %v454, %v453
        %v500 = vpack.c.b16 %v456, %v455
        %v501 = vpack.c.b16 %v458, %v457
        %v502 = vpack.c.b16 %v460, %v459
        %v503 = vpack.c.b16 %v462, %v461
        %v504 = vpack.c.b16 %v464, %v463
        %v505 = vpack.c.b16 %v466, %v465
        %v506 = vpack.c.b16 %v468, %v467
        %v507 = vpack.c.b16 %v470, %v469
        %v508 = vpack.c.b16 %v472, %v471
        %v509 = vpack.c.b16 %v474, %v473
        %v510 = vpack.c.b16 %v476, %v475
        %v511 = vpack.c.b16 %v478, %v477
        %v512 = vpack.c.b16 %v480, %v479
        %545 = vmatprep.subr.bf16.mxu0 0
        %546 = vmatpush1.bf16.msra.mxu0 %v481
        %547 = vmatprep.subr.bf16.mxu0 0
        %548 = vmatpush1.bf16.msra.mxu0 %v482
        %549 = vmatprep.subr.bf16.mxu0 0
        %550 = vmatpush1.bf16.msra.mxu0 %v483
        %551 = vmatprep.subr.bf16.mxu0 0
        %552 = vmatpush1.bf16.msra.mxu0 %v484
        %553 = vmatprep.subr.bf16.mxu0 0
        %554 = vmatpush1.bf16.msra.mxu0 %v485
        %555 = vmatprep.subr.bf16.mxu0 0
        %556 = vmatpush1.bf16.msra.mxu0 %v486
        %557 = vmatprep.subr.bf16.mxu0 0
        %558 = vmatpush1.bf16.msra.mxu0 %v487
        %559 = vmatprep.subr.bf16.mxu0 0
        %560 = vmatpush1.bf16.msra.mxu0 %v488
        %561 = vmatprep.subr.bf16.mxu0 0
        %562 = vmatpush1.bf16.msra.mxu0 %v489
        %563 = vmatprep.subr.bf16.mxu0 0
        %564 = vmatpush1.bf16.msra.mxu0 %v490
        %565 = vmatprep.subr.bf16.mxu0 0
        %566 = vmatpush1.bf16.msra.mxu0 %v491
        %567 = vmatprep.subr.bf16.mxu0 0
        %568 = vmatpush1.bf16.msra.mxu0 %v492
        %569 = vmatprep.subr.bf16.mxu0 0
        %570 = vmatpush1.bf16.msra.mxu0 %v493
        %571 = vmatprep.subr.bf16.mxu0 0
        %572 = vmatpush1.bf16.msra.mxu0 %v494
        %573 = vmatprep.subr.bf16.mxu0 0
        %574 = vmatpush1.bf16.msra.mxu0 %v495
        %575 = vmatprep.subr.bf16.mxu0 0
        %576 = vmatpush1.bf16.msra.mxu0 %v496
        %577 = vmatprep.mubr.bf16.mxu0 %v338
        %578 = vmatmul.mubr.bf16.gmra.mrb[0].mxu0 %v337
        %v579 = vpop.f32.mrb[0].mxu0
        %v580 = vadd.f32 0.0, %v579
        %v581 = vpop.f32.mrb[0].mxu0
        %v582 = vpop.f32.mrb[0].mxu0
        %v583 = vadd.f32 0.0, %v582
        %v584 = vpop.f32.mrb[0].mxu0
        %585 = vmatprep.mubr.bf16.mxu0 %v342
        %586 = vmatmul.mubr.bf16.gmra.mrb[0].mxu0 %v341
        %v587 = vpop.f32.mrb[0].mxu0
        %v588 = vadd.f32 0.0, %v587
        %v589 = vpop.f32.mrb[0].mxu0
        %v590 = vpop.f32.mrb[0].mxu0
        %v591 = vadd.f32 0.0, %v590
        %v592 = vpop.f32.mrb[0].mxu0
        %593 = vdwg.mxu0
        %594 = vmatprep.subr.bf16.mxu0 0
        %595 = vmatpush1.bf16.msra.mxu0 %v497
        %596 = vmatprep.subr.bf16.mxu0 0
        %597 = vmatpush1.bf16.msra.mxu0 %v498
        %598 = vmatprep.subr.bf16.mxu0 0
        %599 = vmatpush1.bf16.msra.mxu0 %v499
        %600 = vmatprep.subr.bf16.mxu0 0
        %601 = vmatpush1.bf16.msra.mxu0 %v500
        %602 = vmatprep.subr.bf16.mxu0 0
        %603 = vmatpush1.bf16.msra.mxu0 %v501
        %604 = vmatprep.subr.bf16.mxu0 0
        %605 = vmatpush1.bf16.msra.mxu0 %v502
        %606 = vmatprep.subr.bf16.mxu0 0
        %607 = vmatpush1.bf16.msra.mxu0 %v503
        %608 = vmatprep.subr.bf16.mxu0 0
        %609 = vmatpush1.bf16.msra.mxu0 %v504
        %610 = vmatprep.subr.bf16.mxu0 0
        %611 = vmatpush1.bf16.msra.mxu0 %v505
        %612 = vmatprep.subr.bf16.mxu0 0
        %613 = vmatpush1.bf16.msra.mxu0 %v506
        %614 = vmatprep.subr.bf16.mxu0 0
        %615 = vmatpush1.bf16.msra.mxu0 %v507
        %616 = vmatprep.subr.bf16.mxu0 0
        %617 = vmatpush1.bf16.msra.mxu0 %v508
        %618 = vmatprep.subr.bf16.mxu0 0
        %619 = vmatpush1.bf16.msra.mxu0 %v509
        %620 = vmatprep.subr.bf16.mxu0 0
        %621 = vmatpush1.bf16.msra.mxu0 %v510
        %622 = vmatprep.subr.bf16.mxu0 0
        %623 = vmatpush1.bf16.msra.mxu0 %v511
        %624 = vmatprep.subr.bf16.mxu0 0
        %625 = vmatpush1.bf16.msra.mxu0 %v512
        %626 = vmatprep.mubr.bf16.mxu0 %v340
        %627 = vmatmul.mubr.bf16.gmra.mrb[0].mxu0 %v339
        %v628 = vpop.f32.mrb[0].mxu0
        %v629 = vadd.f32 %v580, %v628
        %v630 = vpop.f32.mrb[0].mxu0
        %v631 = vpop.f32.mrb[0].mxu0
        %v632 = vadd.f32 %v583, %v631
        %v633 = vpop.f32.mrb[0].mxu0
        %634 = vmatprep.mubr.bf16.mxu0 %v344
        %635 = vmatmul.mubr.bf16.gmra.mrb[0].mxu0 %v343
        %v636 = vpop.f32.mrb[0].mxu0
        %v637 = vadd.f32 %v588, %v636
        %v638 = vpop.f32.mrb[0].mxu0
        %v639 = vpop.f32.mrb[0].mxu0
        %v640 = vadd.f32 %v591, %v639
        %v641 = vpop.f32.mrb[0].mxu0
        %642 = vdwg.mxu0
        %v643 = vadd.f32 %v237, %v629
        %v644 = vadd.f32 %v238, %v632
        %v645 = vadd.f32 %v239, %v637
        %v646 = vadd.f32 %v240, %v640
        %647 = vst [vmem:[#allocation2] sm:$0xff] %v643
        %648 = vst [vmem:[#allocation2 + $0x8] sm:$0xff] %v644
        %649 = vst [vmem:[#allocation2 + $0x10] sm:$0xff] %v645
        %650 = vst [vmem:[#allocation2 + $0x18] sm:$0xff] %v646
        %p651 = scmp.eq.s32.totalorder %s27, 1
        // Predicated region
        $region41: #{_forward_impl.5} parent=27 // pred_check
          %p652 = pneg %p651
        $region42: #{_forward_impl.5} parent=27 // pred_check_branch
          %654 = sbr.rel (%p652) target = $region44
        $region43: #{_forward_impl.5} parent=27 // pred_region
          %v655 = vld [vmem:[#allocation2] sm:$0xff]
          %v656 = vld [vmem:[#allocation2 + $0x8] sm:$0xff]
          %v657 = vld [vmem:[#allocation2 + $0x10] sm:$0xff]
          %v658 = vld [vmem:[#allocation2 + $0x18] sm:$0xff]
          %vm659 = vcmp.ge.f32.partialorder %v655, 0.0
          %vm660 = vcmp.ge.f32.partialorder %v656, 0.0
          %vm661 = vcmp.ge.f32.partialorder %v657, 0.0
          %vm662 = vcmp.ge.f32.partialorder %v658, 0.0
          %v663 = vmul.f32 %v655, 0.2
          %v664 = vmul.f32 %v656, 0.2
          %v665 = vmul.f32 %v657, 0.2
          %v666 = vmul.f32 %v658, 0.2
          %v667 = vsel %vm659, %v655, %v663
          %v668 = vsel %vm660, %v656, %v664
          %v669 = vsel %vm661, %v657, %v665
          %v670 = vsel %vm662, %v658, %v666
          %v671 = vpack.c.bf16 %v668, %v667
          %v672 = vpack.c.bf16 %v670, %v669
          %v675 = vunpack.c.l.b16 %v671
          %v676 = vunpack.c.h.b16 %v671
          %v677 = vunpack.c.l.b16 %v672
          %v678 = vunpack.c.h.b16 %v672
          %v679 = vpack.c.b16 %v675, %v675
          %v680 = vpack.c.b16 %v676, %v676
          %v681 = vpack.c.b16 %v677, %v677
          %v682 = vpack.c.b16 %v678, %v678
          %687 = vst [vmem:[#allocation8] sm:$0xf] %v679
          %688 = vst [vmem:[#allocation8 + $0x4] sm:$0xf] %v680
          %689 = vst [vmem:[#allocation8 + $0x8] sm:$0xf] %v681
          %690 = vst [vmem:[#allocation8 + $0xc] sm:$0xf] %v682
        $region44: #{_forward_impl.5} parent=27 // pred_fallthru
          _
        // Predicated region
        $region45: #{_forward_impl.5} parent=27 // pred_check
          %p691 = pneg %p115
        $region46: #{_forward_impl.5} parent=27 // pred_check_branch
          %693 = sbr.rel (%p691) target = $region48
        $region47: #{_forward_impl.5} parent=27 // pred_region
          %s694 = smul.u32 4, %s25
          %s696 = ssub.s32 256, 256
          %697 = vsyncadd [#allocation5], %s696
          %s698 = sadd.s32 %s26, %s694
          %s699 = smul.addr %s698, 64
          %s700 = scalar_lea.hbm %s2, %s699
          %s701 = sshll.u32 [#allocation8], 4
          %s702 = int_to_ptr.vmem [resolvable:$true] %s701
          %707 = dma.vmem_to_hbm [thread:$0]  %s702, 256, %s700, [#allocation5], 64, 64, 4
        $region48: #{_forward_impl.5} parent=27 // pred_fallthru
          _
        // Predicated region
        $region49: #{_forward_impl.5} parent=27 // pred_check
          %p708 = pneg %p115
        $region50: #{_forward_impl.5} parent=27 // pred_check_branch
          %710 = sbr.rel (%p708) target = $region52
        $region51: #{_forward_impl.5} parent=27 // pred_region
          %711 = dma.done [#allocation5], 256
        $region52: #{_forward_impl.5} parent=27 // pred_fallthru
          _
      $region28: #{_forward_impl.5} parent=5 // pred_fallthru
        _
      %p712 = scmp.le.s32.totalorder 2, %s15
      // Predicated region
      $region53: #{_forward_impl.5} parent=5 // pred_check
        %p713 = pneg %p712
      $region54: #{_forward_impl.5} parent=5 // pred_check_branch
        %715 = sbr.rel (%p713) target = $region56
      $region55: #{_forward_impl.5} parent=5 // pred_region
        %s716 = ssub.s32 %s15, 2
      $region56: #{_forward_impl.5} parent=5 // pred_fallthru
        _
    $region6: #{_forward_impl.5} parent=1 // loop_footer
      %s19 = sadd.s32 1, %s15
    $region7: #{_forward_impl.5} parent=1 // loop_footer_branch
      %14 = sbr.rel target = $region3
    $region8: #{_forward_impl.5} parent=1 // loop_exit
      _
    %717 = vsyncpa [#allocation4], 1
    %s718 = scalar_lea.sflag [#allocation4], 1
    %719 = vsyncpa %s718, 1
    %720 = vsyncpa [#allocation7], 1
    %s721 = scalar_lea.sflag [#allocation7], 1
    %722 = vsyncpa %s721, 1
    %723 = vsyncpa [#allocation5], 1
    %s724 = scalar_lea.sflag [#allocation5], 1
    %725 = vsyncpa %s724, 1

// kernel: _forward_impl.7
$region0: #{_forward_impl.7}
  #allocation0 [shape = 'u32[]', space=smem, size = 0x4, offset = 0x4, fixed_abs, tag = 'smem constant byte address 0x4 - core index']
  #allocation1 [shape = 'u32[144,128]{1,0:T(1,128)}', space=vmem, size = 0x12000, scoped, tag = 'internal scratch']
  #allocation2 [shape = 'f32[1]{0:T(128)S(6)}', space=smem, size = 0x200, scoped, tag = 'scoped memory for _forward_impl.7']
  %s0 = inlined_call_operand.vmem [shape: f32[8,128], index: 0, kind: input, shape index: {}]
  %s1 = inlined_call_operand.vmem [shape: f32[1,128], index: 1, kind: input, shape index: {}]
  %s2 = inlined_call_operand.<no memory space> [shape: f32[1], index: 2, kind: input, shape index: {}]
  %s3 = inlined_call_operand.vmem [shape: f32[8,1], index: 3, kind: output, shape index: {}]
  %s4 = sld [smem:[#allocation0]]
  $region22: #{_forward_impl.7} parent=0
    _
  %s6 = ssub.s32 1, %s4
  %s7 = scalar_select 0, %s6, %s4
  %8 = sst [smem:[#allocation2]] %s2
  // Predicated region
  $region2: #{_forward_impl.7} parent=0 // pred_check
    _
  $region3: #{_forward_impl.7} parent=0 // pred_check_branch
    %10 = sbr.rel (0) target = $region5
  $region4: #{_forward_impl.7} parent=0 // pred_region
    _
  $region5: #{_forward_impl.7} parent=0 // pred_fallthru
    _
  // Predicated region
  $region6: #{_forward_impl.7} parent=0 // pred_check
    _
  $region7: #{_forward_impl.7} parent=0 // pred_check_branch
    %12 = sbr.rel (0) target = $region9
  $region8: #{_forward_impl.7} parent=0 // pred_region
    _
  $region9: #{_forward_impl.7} parent=0 // pred_fallthru
    _
  // Predicated region
  $region10: #{_forward_impl.7} parent=0 // pred_check
    _
  $region11: #{_forward_impl.7} parent=0 // pred_check_branch
    %14 = sbr.rel (0) target = $region13
  $region12: #{_forward_impl.7} parent=0 // pred_region
    _
  $region13: #{_forward_impl.7} parent=0 // pred_fallthru
    _
  %s15 = sld [smem:[#allocation2]]
  %v16 = vld [vmem:[%s0] sm:$0xff]
  %v17 = vld [vmem:[%s1] sm:$0x1]
  %v19 = vlaneseq
  %v20 = vshrl.u32 %v19, 7
  %v21 = vsub.s32 0, %v20
  %v22 = vrot.slane %v17, %v21
  %v24 = vmul.f32 %v16, %v22
  %25 = vadd.xlane.f32.xlu0 %v24
  %v26 = vpop.xlane.xlu0 %25
  %v27 = vstv %s15
  %v28 = vadd.f32 %v26, %v27
  %v29 = vand.u32 2147483647, %v28
  %v30 = vsub.f32 0.0, %v29
  %v31 = vmul.f32 %v30, 1.442695
  %v32 = vpow.pop %v31
  %vm33 = vcmp.ge.f32.partialorder %v28, 0.0
  %v34 = vadd.f32 %v32, 1.0
  %v35 = vrcp.pop %v34
  %v36 = vmul.f32 1.0, %v35
  %v37 = vmul.f32 %v32, %v35
  %v38 = vsel %vm33, %v36, %v37
  %vm39 = vcmask 7168
  %40 = vst.msk [vmem:[%s3] sm:$0xff] %vm39, %v38
  // Predicated region
  $region14: #{_forward_impl.7} parent=0 // pred_check
    _
  $region15: #{_forward_impl.7} parent=0 // pred_check_branch
    %42 = sbr.rel (0) target = $region17
  $region16: #{_forward_impl.7} parent=0 // pred_region
    _
  $region17: #{_forward_impl.7} parent=0 // pred_fallthru
    _
  // Predicated region
  $region18: #{_forward_impl.7} parent=0 // pred_check
    _
  $region19: #{_forward_impl.7} parent=0 // pred_check_branch
    %44 = sbr.rel (0) target = $region21
  $region20: #{_forward_impl.7} parent=0 // pred_region
    _
  $region21: #{_forward_impl.7} parent=0 // pred_fallthru
    _

// kernel: _forward_impl.6
$region0: #{_forward_impl.6}
  #allocation0 [shape = 'u32[]', space=smem, size = 0x4, offset = 0x4, fixed_abs, tag = 'smem constant byte address 0x4 - core index']
  #allocation1 [shape = 'u32[144,128]{1,0:T(1,128)}', space=vmem, size = 0x12000, scoped, tag = 'internal scratch']
  #allocation2 [shape = 'f32[16,128]{1,0:T(8,128)}', space=vmem, size = 0x2000, scoped, tag = 'scratch operand']
  %s0 = inlined_call_operand.hbm [shape: bf16[16,512], index: 0, kind: input, shape index: {}]
  %s1 = inlined_call_operand.hbm [shape: bf16[512,128], index: 1, kind: input, shape index: {}]
  %s2 = inlined_call_operand.hbm [shape: bf16[16,128], index: 2, kind: output, shape index: {}]
  %s3 = sld [smem:[#allocation0]]
  $region34: #{_forward_impl.6} parent=0
    _
  %s5 = ssub.s32 1, %s3
  %s6 = scalar_select 0, %s5, %s3
  $region1: #{_forward_impl.6} parent=0
    #allocation3 [shape = 'u8[16384]{0}', space=vmem, size = 0x4000, scoped, tag = 'input window, operand 0, single buffered']
    #allocation4 [shape = 's32[1]{0}', space=sflag, size = 0x4, scoped, tag = 'scoped memory for _forward_impl.6']
    #allocation5 [shape = 's32[1]{0}', space=sflag, size = 0x4, scoped, tag = 'scoped memory for _forward_impl.6']
    #allocation6 [shape = 'u8[131072]{0}', space=vmem, size = 0x20000, scoped, tag = 'input window, operand 1, single buffered']
    #allocation7 [shape = 's32[1]{0}', space=sflag, size = 0x4, scoped, tag = 'scoped memory for _forward_impl.6']
    #allocation8 [shape = 'u8[4096]{0}', space=vmem, size = 0x1000, scoped, tag = 'output window, operand 0, single buffered']
    %7 = vsyncpa [#allocation4], 0
    %8 = vsyncpa [#allocation7], 0
    %9 = vsyncpa [#allocation5], 0
    // Predicated region
    $region2: #{_forward_impl.6} parent=1 // pred_check
      _
    $region3: #{_forward_impl.6} parent=1 // pred_check_branch
      %11 = sbr.rel (0) target = $region5
    $region4: #{_forward_impl.6} parent=1 // pred_region
      %s13 = ssub.s32 512, 512
      %14 = vsyncadd [#allocation4], %s13
      %s15 = sshll.u32 [#allocation3], 4
      %s16 = int_to_ptr.vmem [resolvable:$true] %s15
      %21 = dma.hbm_to_vmem [thread:$0]  %s0, 512, %s16, [#allocation4], 256, 256, 16
    $region5: #{_forward_impl.6} parent=1 // pred_fallthru
      _
    // Predicated region
    $region6: #{_forward_impl.6} parent=1 // pred_check
      _
    $region7: #{_forward_impl.6} parent=1 // pred_check_branch
      %23 = sbr.rel (0) target = $region9
    $region8: #{_forward_impl.6} parent=1 // pred_region
      %s25 = ssub.s32 4096, 4096
      %26 = vsyncadd [#allocation7], %s25
      %s27 = sshll.u32 [#allocation6], 4
      %s28 = int_to_ptr.vmem [resolvable:$true] %s27
      %33 = dma.hbm_to_vmem [thread:$0]  %s1, 4096, %s28, [#allocation7], 64, 64, 4
    $region9: #{_forward_impl.6} parent=1 // pred_fallthru
      _
    // Predicated region
    $region10: #{_forward_impl.6} parent=1 // pred_check
      _
    $region11: #{_forward_impl.6} parent=1 // pred_check_branch
      %35 = sbr.rel (0) target = $region13
    $region12: #{_forward_impl.6} parent=1 // pred_region
      %36 = dma.done [#allocation4], 512
    $region13: #{_forward_impl.6} parent=1 // pred_fallthru
      _
    // Predicated region
    $region14: #{_forward_impl.6} parent=1 // pred_check
      _
    $region15: #{_forward_impl.6} parent=1 // pred_check_branch
      %38 = sbr.rel (0) target = $region17
    $region16: #{_forward_impl.6} parent=1 // pred_region
      %39 = dma.done [#allocation7], 4096
    $region17: #{_forward_impl.6} parent=1 // pred_fallthru
      _
    %p41 = scmp.eq.s32.totalorder 0, 0
    // Predicated region
    $region18: #{_forward_impl.6} parent=1 // pred_check
      %p42 = pneg %p41
    $region19: #{_forward_impl.6} parent=1 // pred_check_branch
      %44 = sbr.rel (%p42) target = $region21
    $region20: #{_forward_impl.6} parent=1 // pred_region
      %45 = vst [vmem:[#allocation2] sm:$0xff] 0.0
      %46 = vst [vmem:[#allocation2 + $0x8] sm:$0xff] 0.0
    $region21: #{_forward_impl.6} parent=1 // pred_fallthru
      _
    %v47 = vld [vmem:[#allocation2] sm:$0xff]
    %v48 = vld [vmem:[#allocation2 + $0x8] sm:$0xff]
    %v49 = vld [vmem:[#allocation3] sm:$0xff]
    %v50 = vld [vmem:[#allocation3 + $0x8] sm:$0xff]
    %v51 = vld [vmem:[#allocation3 + $0x10] sm:$0xff]
    %v52 = vld [vmem:[#allocation3 + $0x18] sm:$0xff]
    %v53 = vld [vmem:[#allocation6] sm:$0xf]
    %v54 = vld [vmem:[#allocation6 + $0x4] sm:$0xf]
    %v55 = vld [vmem:[#allocation6 + $0x8] sm:$0xf]
    %v56 = vld [vmem:[#allocation6 + $0xc] sm:$0xf]
    %v57 = vld [vmem:[#allocation6 + $0x10] sm:$0xf]
    %v58 = vld [vmem:[#allocation6 + $0x14] sm:$0xf]
    %v59 = vld [vmem:[#allocation6 + $0x18] sm:$0xf]
    %v60 = vld [vmem:[#allocation6 + $0x1c] sm:$0xf]
    %v61 = vld [vmem:[#allocation6 + $0x20] sm:$0xf]
    %v62 = vld [vmem:[#allocation6 + $0x24] sm:$0xf]
    %v63 = vld [vmem:[#allocation6 + $0x28] sm:$0xf]
    %v64 = vld [vmem:[#allocation6 + $0x2c] sm:$0xf]
    %v65 = vld [vmem:[#allocation6 + $0x30] sm:$0xf]
    %v66 = vld [vmem:[#allocation6 + $0x34] sm:$0xf]
    %v67 = vld [vmem:[#allocation6 + $0x38] sm:$0xf]
    %v68 = vld [vmem:[#allocation6 + $0x3c] sm:$0xf]
    %v69 = vld [vmem:[#allocation6 + $0x40] sm:$0xf]
    %v70 = vld [vmem:[#allocation6 + $0x44] sm:$0xf]
    %v71 = vld [vmem:[#allocation6 + $0x48] sm:$0xf]
    %v72 = vld [vmem:[#allocation6 + $0x4c] sm:$0xf]
    %v73 = vld [vmem:[#allocation6 + $0x50] sm:$0xf]
    %v74 = vld [vmem:[#allocation6 + $0x54] sm:$0xf]
    %v75 = vld [vmem:[#allocation6 + $0x58] sm:$0xf]
    %v76 = vld [vmem:[#allocation6 + $0x5c] sm:$0xf]
    %v77 = vld [vmem:[#allocation6 + $0x60] sm:$0xf]
    %v78 = vld [vmem:[#allocation6 + $0x64] sm:$0xf]
    %v79 = vld [vmem:[#allocation6 + $0x68] sm:$0xf]
    %v80 = vld [vmem:[#allocation6 + $0x6c] sm:$0xf]
    %v81 = vld [vmem:[#allocation6 + $0x70] sm:$0xf]
    %v82 = vld [vmem:[#allocation6 + $0x74] sm:$0xf]
    %v83 = vld [vmem:[#allocation6 + $0x78] sm:$0xf]
    %v84 = vld [vmem:[#allocation6 + $0x7c] sm:$0xf]
    %v85 = vld [vmem:[#allocation6 + $0x80] sm:$0xf]
    %v86 = vld [vmem:[#allocation6 + $0x84] sm:$0xf]
    %v87 = vld [vmem:[#allocation6 + $0x88] sm:$0xf]
    %v88 = vld [vmem:[#allocation6 + $0x8c] sm:$0xf]
    %v89 = vld [vmem:[#allocation6 + $0x90] sm:$0xf]
    %v90 = vld [vmem:[#allocation6 + $0x94] sm:$0xf]
    %v91 = vld [vmem:[#allocation6 + $0x98] sm:$0xf]
    %v92 = vld [vmem:[#allocation6 + $0x9c] sm:$0xf]
    %v93 = vld [vmem:[#allocation6 + $0xa0] sm:$0xf]
    %v94 = vld [vmem:[#allocation6 + $0xa4] sm:$0xf]
    %v95 = vld [vmem:[#allocation6 + $0xa8] sm:$0xf]
    %v96 = vld [vmem:[#allocation6 + $0xac] sm:$0xf]
    %v97 = vld [vmem:[#allocation6 + $0xb0] sm:$0xf]
    %v98 = vld [vmem:[#allocation6 + $0xb4] sm:$0xf]
    %v99 = vld [vmem:[#allocation6 + $0xb8] sm:$0xf]
    %v100 = vld [vmem:[#allocation6 + $0xbc] sm:$0xf]
    %v101 = vld [vmem:[#allocation6 + $0xc0] sm:$0xf]
    %v102 = vld [vmem:[#allocation6 + $0xc4] sm:$0xf]
    %v103 = vld [vmem:[#allocation6 + $0xc8] sm:$0xf]
    %v104 = vld [vmem:[#allocation6 + $0xcc] sm:$0xf]
    %v105 = vld [vmem:[#allocation6 + $0xd0] sm:$0xf]
    %v106 = vld [vmem:[#allocation6 + $0xd4] sm:$0xf]
    %v107 = vld [vmem:[#allocation6 + $0xd8] sm:$0xf]
    %v108 = vld [vmem:[#allocation6 + $0xdc] sm:$0xf]
    %v109 = vld [vmem:[#allocation6 + $0xe0] sm:$0xf]
    %v110 = vld [vmem:[#allocation6 + $0xe4] sm:$0xf]
    %v111 = vld [vmem:[#allocation6 + $0xe8] sm:$0xf]
    %v112 = vld [vmem:[#allocation6 + $0xec] sm:$0xf]
    %v113 = vld [vmem:[#allocation6 + $0xf0] sm:$0xf]
    %v114 = vld [vmem:[#allocation6 + $0xf4] sm:$0xf]
    %v115 = vld [vmem:[#allocation6 + $0xf8] sm:$0xf]
    %v116 = vld [vmem:[#allocation6 + $0xfc] sm:$0xf]
    %v121 = vunpack.c.l.b16 %v49
    %v122 = vunpack.c.h.b16 %v49
    %v123 = vunpack.c.l.b16 %v50
    %v124 = vunpack.c.h.b16 %v50
    %v125 = vunpack.c.l.b16 %v51
    %v126 = vunpack.c.h.b16 %v51
    %v127 = vunpack.c.l.b16 %v52
    %v128 = vunpack.c.h.b16 %v52
    %v129 = vpack.c.b16 %v125, %v121
    %v130 = vpack.c.b16 %v126, %v122
    %v131 = vpack.c.b16 %v127, %v123
    %v132 = vpack.c.b16 %v128, %v124
    %v201 = vunpack.c.l.b16 %v53
    %v202 = vunpack.c.l.b16 %v54
    %v203 = vunpack.c.l.b16 %v55
    %v204 = vunpack.c.l.b16 %v56
    %v205 = vunpack.c.l.b16 %v57
    %v206 = vunpack.c.l.b16 %v58
    %v207 = vunpack.c.l.b16 %v59
    %v208 = vunpack.c.l.b16 %v60
    %v209 = vunpack.c.l.b16 %v61
    %v210 = vunpack.c.l.b16 %v62
    %v211 = vunpack.c.l.b16 %v63
    %v212 = vunpack.c.l.b16 %v64
    %v213 = vunpack.c.l.b16 %v65
    %v214 = vunpack.c.l.b16 %v66
    %v215 = vunpack.c.l.b16 %v67
    %v216 = vunpack.c.l.b16 %v68
    %v217 = vunpack.c.l.b16 %v69
    %v218 = vunpack.c.l.b16 %v70
    %v219 = vunpack.c.l.b16 %v71
    %v220 = vunpack.c.l.b16 %v72
    %v221 = vunpack.c.l.b16 %v73
    %v222 = vunpack.c.l.b16 %v74
    %v223 = vunpack.c.l.b16 %v75
    %v224 = vunpack.c.l.b16 %v76
    %v225 = vunpack.c.l.b16 %v77
    %v226 = vunpack.c.l.b16 %v78
    %v227 = vunpack.c.l.b16 %v79
    %v228 = vunpack.c.l.b16 %v80
    %v229 = vunpack.c.l.b16 %v81
    %v230 = vunpack.c.l.b16 %v82
    %v231 = vunpack.c.l.b16 %v83
    %v232 = vunpack.c.l.b16 %v84
    %v233 = vunpack.c.l.b16 %v85
    %v234 = vunpack.c.l.b16 %v86
    %v235 = vunpack.c.l.b16 %v87
    %v236 = vunpack.c.l.b16 %v88
    %v237 = vunpack.c.l.b16 %v89
    %v238 = vunpack.c.l.b16 %v90
    %v239 = vunpack.c.l.b16 %v91
    %v240 = vunpack.c.l.b16 %v92
    %v241 = vunpack.c.l.b16 %v93
    %v242 = vunpack.c.l.b16 %v94
    %v243 = vunpack.c.l.b16 %v95
    %v244 = vunpack.c.l.b16 %v96
    %v245 = vunpack.c.l.b16 %v97
    %v246 = vunpack.c.l.b16 %v98
    %v247 = vunpack.c.l.b16 %v99
    %v248 = vunpack.c.l.b16 %v100
    %v249 = vunpack.c.l.b16 %v101
    %v250 = vunpack.c.l.b16 %v102
    %v251 = vunpack.c.l.b16 %v103
    %v252 = vunpack.c.l.b16 %v104
    %v253 = vunpack.c.l.b16 %v105
    %v254 = vunpack.c.l.b16 %v106
    %v255 = vunpack.c.l.b16 %v107
    %v256 = vunpack.c.l.b16 %v108
    %v257 = vunpack.c.l.b16 %v109
    %v258 = vunpack.c.l.b16 %v110
    %v259 = vunpack.c.l.b16 %v111
    %v260 = vunpack.c.l.b16 %v112
    %v261 = vunpack.c.l.b16 %v113
    %v262 = vunpack.c.l.b16 %v114
    %v263 = vunpack.c.l.b16 %v115
    %v264 = vunpack.c.l.b16 %v116
    %v265 = vpack.c.b16 %v202, %v201
    %v266 = vpack.c.b16 %v204, %v203
    %v267 = vpack.c.b16 %v206, %v205
    %v268 = vpack.c.b16 %v208, %v207
    %v269 = vpack.c.b16 %v210, %v209
    %v270 = vpack.c.b16 %v212, %v211
    %v271 = vpack.c.b16 %v214, %v213
    %v272 = vpack.c.b16 %v216, %v215
    %v273 = vpack.c.b16 %v218, %v217
    %v274 = vpack.c.b16 %v220, %v219
    %v275 = vpack.c.b16 %v222, %v221
    %v276 = vpack.c.b16 %v224, %v223
    %v277 = vpack.c.b16 %v226, %v225
    %v278 = vpack.c.b16 %v228, %v227
    %v279 = vpack.c.b16 %v230, %v229
    %v280 = vpack.c.b16 %v232, %v231
    %v281 = vpack.c.b16 %v234, %v233
    %v282 = vpack.c.b16 %v236, %v235
    %v283 = vpack.c.b16 %v238, %v237
    %v284 = vpack.c.b16 %v240, %v239
    %v285 = vpack.c.b16 %v242, %v241
    %v286 = vpack.c.b16 %v244, %v243
    %v287 = vpack.c.b16 %v246, %v245
    %v288 = vpack.c.b16 %v248, %v247
    %v289 = vpack.c.b16 %v250, %v249
    %v290 = vpack.c.b16 %v252, %v251
    %v291 = vpack.c.b16 %v254, %v253
    %v292 = vpack.c.b16 %v256, %v255
    %v293 = vpack.c.b16 %v258, %v257
    %v294 = vpack.c.b16 %v260, %v259
    %v295 = vpack.c.b16 %v262, %v261
    %v296 = vpack.c.b16 %v264, %v263
    %329 = vmatprep.subr.bf16.mxu0 0
    %330 = vmatpush1.bf16.msra.mxu0 %v265
    %331 = vmatprep.subr.bf16.mxu0 0
    %332 = vmatpush1.bf16.msra.mxu0 %v266
    %333 = vmatprep.subr.bf16.mxu0 0
    %334 = vmatpush1.bf16.msra.mxu0 %v267
    %335 = vmatprep.subr.bf16.mxu0 0
    %336 = vmatpush1.bf16.msra.mxu0 %v268
    %337 = vmatprep.subr.bf16.mxu0 0
    %338 = vmatpush1.bf16.msra.mxu0 %v269
    %339 = vmatprep.subr.bf16.mxu0 0
    %340 = vmatpush1.bf16.msra.mxu0 %v270
    %341 = vmatprep.subr.bf16.mxu0 0
    %342 = vmatpush1.bf16.msra.mxu0 %v271
    %343 = vmatprep.subr.bf16.mxu0 0
    %344 = vmatpush1.bf16.msra.mxu0 %v272
    %345 = vmatprep.subr.bf16.mxu0 0
    %346 = vmatpush1.bf16.msra.mxu0 %v273
    %347 = vmatprep.subr.bf16.mxu0 0
    %348 = vmatpush1.bf16.msra.mxu0 %v274
    %349 = vmatprep.subr.bf16.mxu0 0
    %350 = vmatpush1.bf16.msra.mxu0 %v275
    %351 = vmatprep.subr.bf16.mxu0 0
    %352 = vmatpush1.bf16.msra.mxu0 %v276
    %353 = vmatprep.subr.bf16.mxu0 0
    %354 = vmatpush1.bf16.msra.mxu0 %v277
    %355 = vmatprep.subr.bf16.mxu0 0
    %356 = vmatpush1.bf16.msra.mxu0 %v278
    %357 = vmatprep.subr.bf16.mxu0 0
    %358 = vmatpush1.bf16.msra.mxu0 %v279
    %359 = vmatprep.subr.bf16.mxu0 0
    %360 = vmatpush1.bf16.msra.mxu0 %v280
    %361 = vmatprep.mubr.bf16.mxu0 %v130
    %362 = vmatmul.mubr.bf16.gmra.mrb[0].mxu0 %v129
    %v363 = vpop.f32.mrb[0].mxu0
    %v364 = vadd.f32 0.0, %v363
    %v365 = vpop.f32.mrb[0].mxu0
    %v366 = vpop.f32.mrb[0].mxu0
    %v367 = vadd.f32 0.0, %v366
    %v368 = vpop.f32.mrb[0].mxu0
    %369 = vdwg.mxu0
    %370 = vmatprep.subr.bf16.mxu0 0
    %371 = vmatpush1.bf16.msra.mxu0 %v281
    %372 = vmatprep.subr.bf16.mxu0 0
    %373 = vmatpush1.bf16.msra.mxu0 %v282
    %374 = vmatprep.subr.bf16.mxu0 0
    %375 = vmatpush1.bf16.msra.mxu0 %v283
    %376 = vmatprep.subr.bf16.mxu0 0
    %377 = vmatpush1.bf16.msra.mxu0 %v284
    %378 = vmatprep.subr.bf16.mxu0 0
    %379 = vmatpush1.bf16.msra.mxu0 %v285
    %380 = vmatprep.subr.bf16.mxu0 0
    %381 = vmatpush1.bf16.msra.mxu0 %v286
    %382 = vmatprep.subr.bf16.mxu0 0
    %383 = vmatpush1.bf16.msra.mxu0 %v287
    %384 = vmatprep.subr.bf16.mxu0 0
    %385 = vmatpush1.bf16.msra.mxu0 %v288
    %386 = vmatprep.subr.bf16.mxu0 0
    %387 = vmatpush1.bf16.msra.mxu0 %v289
    %388 = vmatprep.subr.bf16.mxu0 0
    %389 = vmatpush1.bf16.msra.mxu0 %v290
    %390 = vmatprep.subr.bf16.mxu0 0
    %391 = vmatpush1.bf16.msra.mxu0 %v291
    %392 = vmatprep.subr.bf16.mxu0 0
    %393 = vmatpush1.bf16.msra.mxu0 %v292
    %394 = vmatprep.subr.bf16.mxu0 0
    %395 = vmatpush1.bf16.msra.mxu0 %v293
    %396 = vmatprep.subr.bf16.mxu0 0
    %397 = vmatpush1.bf16.msra.mxu0 %v294
    %398 = vmatprep.subr.bf16.mxu0 0
    %399 = vmatpush1.bf16.msra.mxu0 %v295
    %400 = vmatprep.subr.bf16.mxu0 0
    %401 = vmatpush1.bf16.msra.mxu0 %v296
    %402 = vmatprep.mubr.bf16.mxu0 %v132
    %403 = vmatmul.mubr.bf16.gmra.mrb[0].mxu0 %v131
    %v404 = vpop.f32.mrb[0].mxu0
    %v405 = vadd.f32 %v364, %v404
    %v406 = vpop.f32.mrb[0].mxu0
    %v407 = vpop.f32.mrb[0].mxu0
    %v408 = vadd.f32 %v367, %v407
    %v409 = vpop.f32.mrb[0].mxu0
    %410 = vdwg.mxu0
    %v411 = vadd.f32 %v47, %v405
    %v412 = vadd.f32 %v48, %v408
    %413 = vst [vmem:[#allocation2] sm:$0xff] %v411
    %414 = vst [vmem:[#allocation2 + $0x8] sm:$0xff] %v412
    // Predicated region
    $region22: #{_forward_impl.6} parent=1 // pred_check
      %p415 = pneg %p41
    $region23: #{_forward_impl.6} parent=1 // pred_check_branch
      %417 = sbr.rel (%p415) target = $region25
    $region24: #{_forward_impl.6} parent=1 // pred_region
      %v418 = vld [vmem:[#allocation2] sm:$0xff]
      %v419 = vld [vmem:[#allocation2 + $0x8] sm:$0xff]
      %vm420 = vcmp.ge.f32.partialorder %v418, 0.0
      %vm421 = vcmp.ge.f32.partialorder %v419, 0.0
      %v422 = vmul.f32 %v418, 0.2
      %v423 = vmul.f32 %v419, 0.2
      %v424 = vsel %vm420, %v418, %v422
      %v425 = vsel %vm421, %v419, %v423
      %v426 = vpack.c.bf16 %v425, %v424
      %v428 = vunpack.c.l.b16 %v426
      %v429 = vunpack.c.h.b16 %v426
      %v430 = vpack.c.b16 %v428, %v428
      %v431 = vpack.c.b16 %v429, %v429
      %434 = vst [vmem:[#allocation8] sm:$0xf] %v430
      %435 = vst [vmem:[#allocation8 + $0x4] sm:$0xf] %v431
    $region25: #{_forward_impl.6} parent=1 // pred_fallthru
      _
    // Predicated region
    $region26: #{_forward_impl.6} parent=1 // pred_check
      _
    $region27: #{_forward_impl.6} parent=1 // pred_check_branch
      %437 = sbr.rel (0) target = $region29
    $region28: #{_forward_impl.6} parent=1 // pred_region
      %s439 = ssub.s32 128, 128
      %440 = vsyncadd [#allocation5], %s439
      %s441 = sshll.u32 [#allocation8], 4
      %s442 = int_to_ptr.vmem [resolvable:$true] %s441
      %447 = dma.vmem_to_hbm [thread:$0]  %s442, 128, %s2, [#allocation5], 64, 64, 4
    $region29: #{_forward_impl.6} parent=1 // pred_fallthru
      _
    // Predicated region
    $region30: #{_forward_impl.6} parent=1 // pred_check
      _
    $region31: #{_forward_impl.6} parent=1 // pred_check_branch
      %449 = sbr.rel (0) target = $region33
    $region32: #{_forward_impl.6} parent=1 // pred_region
      %450 = dma.done [#allocation5], 128
    $region33: #{_forward_impl.6} parent=1 // pred_fallthru
      _
    %451 = vsyncpa [#allocation4], 1
    %452 = vsyncpa [#allocation7], 1
    %453 = vsyncpa [#allocation5], 1

</llo_original>
